<compile_context>
chip_gen: v7x
topology: tpu7x:2x2x1
jax: 0.10.0
libtpu: 0.0.40
codegen_flags: <defaults>
</compile_context>

<pallas_src>
import functools
import math

import jax
import jax.numpy as jnp
from jax.experimental import pallas as pl
from jax.experimental.pallas import tpu as pltpu

LANE = 128            # lane width
SUB = 8               # sublane width
MAX_TM = 2048         # max row tile
TARGET_STEP_BYTES = 1 << 20   # ~1 MiB streamed per grid step (amortize ~0.35us/step)
FUSE_MAX_NODES = 1024         # fused message+aggregation path threshold


def _device_kind():
    try:
        return jax.devices()[0].device_kind.lower()
    except Exception:
        return ""


_KIND = _device_kind()
_NUM_TC = 2 if ("v7" in _KIND or "7x" in _KIND) else 1            # v7x: 2 TCs/chip
_ACT_DTYPE = jnp.bfloat16 if ("v6" in _KIND or "v7" in _KIND) else jnp.float32


def _round_up(x, m):
    return ((x + m - 1) // m) * m


def _choose_tm(m, row_bytes):
    """Row tile: target ~TARGET_STEP_BYTES streamed bytes per grid step."""
    m8 = _round_up(max(int(m), 1), SUB)
    tm = _round_up(max(TARGET_STEP_BYTES // max(int(row_bytes), 1), SUB), SUB)
    tm = min(tm, MAX_TM, m8)
    if _NUM_TC > 1 and m8 > SUB:
        # v7x: keep >= 2 grid steps so the 'parallel' axis shards across both TCs.
        tm = min(tm, _round_up((m8 + 1) // 2, SUB))
    return max(tm, SUB)


def _choose_te(e, np_nodes):
    """Edge tile for the fused message+aggregation kernel."""
    e8 = _round_up(max(int(e), 1), SUB)
    if e8 <= 512:
        return e8  # single tile (block == full array, any width is legal)
    # Keep the (TE, Np) f32 one-hot around ~1 MiB; TE must be a multiple of 128
    # so the (1, TE) transposed-index block is a legal BlockSpec.
    budget = max((1 << 20) // max(np_nodes * 4, 1), 128)
    te = min(1024, (budget // 128) * 128)
    return max(te, 128)


def _int_pow(x, n):
    """x**n for compile-time integer n >= 0 via a multiply chain (VPU, no exp/log)."""
    if n == 0:
        return jnp.ones_like(x)
    acc, base = None, x
    while n > 0:
        if n & 1:
            acc = base if acc is None else acc * base
        n >>= 1
        if n:
            base = base * base
    return acc


# ----------------------------- kernel-side helpers -----------------------------

def _bessel_basis(dist_col, freq_row, cutoff, p):
    """PyG-style BesselBasisLayer: envelope(d/c) * sin(freq * d/c).

    Notes (correctness review): no sqrt(2/cutoff) normalization (freqs are n*pi,
    as in the PyG layer); exact reciprocal; zero-length (degenerate) edges get a
    zero basis instead of a clamped 1/d blow-up.
    """
    d = dist_col.astype(jnp.float32) * (1.0 / cutoff)
    valid = d > 1e-12
    d = jnp.where(valid, d, 1.0)
    inv_d = pl.reciprocal(d, approx=False)          # exact (review)
    pa = -(p + 1.0) * (p + 2.0) / 2.0
    pb = p * (p + 2.0)
    pc = -p * (p + 1.0) / 2.0
    d_pm1 = _int_pow(d, int(p) - 1)                 # multiply chain on VPU
    d_p = d_pm1 * d
    d_pp1 = d_p * d
    env = inv_d + pa * d_pm1 + pb * d_p + pc * d_pp1
    basis = env * jnp.sin(freq_row * d)
    return jnp.where(valid, basis, 0.0)


def _mlp_tail(acc, b0_ref, layer_refs):
    """Bias add + SiLU + remaining layers.  acc: f32 layer-0 pre-bias."""
    h = acc + b0_ref[...]                           # bias add in f32
    for (w_ref, b_ref) in layer_refs:
        h = h.astype(_ACT_DTYPE)                    # bf16 SiLU on v6e/v7x, f32 on v5e
        h = h * jax.nn.sigmoid(h)
        h = jnp.dot(h.astype(jnp.bfloat16), w_ref[...],
                    preferred_element_type=jnp.float32) + b_ref[...]
    return h


# ----------------------------- weight preparation -----------------------------

def _prep_mlp_weight_args(weights, biases, k_splits):
    """Pad weights/biases and build (args, specs, padded_widths, resident_bytes).

    Layer 0 is split along K (one chunk per entry of k_splits) so the input
    concat never materializes.  Hidden widths are zero-padded to multiples of
    128 (lane-dense MXU contractions, exact); the LAST layer keeps its native
    output width so the kernel output is not zero-padded in HBM.
    """
    n_layers = len(weights)
    padded_h = [
        _round_up(int(w.shape[1]), LANE) if l < n_layers - 1 else int(w.shape[1])
        for l, w in enumerate(weights)
    ]
    args, specs, nbytes = [], [], 0

    w0, b0 = weights[0], biases[0]
    h0, h0p = int(w0.shape[1]), padded_h[0]
    assert sum(k_splits) == int(w0.shape[0])
    off = 0
    for k in k_splits:
        chunk = jnp.pad(w0[off:off + k, :].astype(jnp.bfloat16),
                        ((0, 0), (0, h0p - h0)))
        off += k
        args.append(chunk)
        specs.append(pl.BlockSpec((k, h0p), lambda i: (0, 0)))
        nbytes += k * h0p * 2
    args.append(jnp.pad(b0.reshape(1, h0).astype(jnp.float32),
                        ((0, 0), (0, h0p - h0))))
    specs.append(pl.BlockSpec((1, h0p), lambda i: (0, 0)))
    nbytes += h0p * 4

    for l in range(1, n_layers):
        w, b = weights[l], biases[l]
        kin, h = int(w.shape[0]), int(w.shape[1])
        kinp, hp = padded_h[l - 1], padded_h[l]
        args.append(jnp.pad(w.astype(jnp.bfloat16),
                            ((0, kinp - kin), (0, hp - h))))
        specs.append(pl.BlockSpec((kinp, hp), lambda i: (0, 0)))
        nbytes += kinp * hp * 2
        args.append(jnp.pad(b.reshape(1, h).astype(jnp.float32),
                            ((0, 0), (0, hp - h))))
        specs.append(pl.BlockSpec((1, hp), lambda i: (0, 0)))
        nbytes += hp * 4
    return args, specs, padded_h, nbytes


# ----------------------------- fused MLP kernel -----------------------------

def _fused_mlp_kernel(n_inputs, n_layers, rbf, *refs):
    """Fused MLP with K-split first layer and optional in-kernel Bessel basis."""
    idx = 0
    x_refs = refs[idx:idx + n_inputs]; idx += n_inputs
    if rbf is not None:
        dist_ref, freq_ref = refs[idx], refs[idx + 1]
        idx += 2
    n_chunks = n_inputs + (1 if rbf is not None else 0)
    w0_refs = refs[idx:idx + n_chunks]; idx += n_chunks
    b0_ref = refs[idx]; idx += 1
    layer_refs = [(refs[idx + 2 * l], refs[idx + 2 * l + 1])
                  for l in range(n_layers - 1)]
    idx += 2 * (n_layers - 1)
    out_ref = refs[idx]

    acc = jnp.dot(x_refs[0][...], w0_refs[0][...], preferred_element_type=jnp.float32)
    for i in range(1, n_inputs):
        acc += jnp.dot(x_refs[i][...], w0_refs[i][...],
                       preferred_element_type=jnp.float32)
    if rbf is not None:
        cutoff, p = rbf
        basis = _bessel_basis(dist_ref[...], freq_ref[...], cutoff, p)
        acc += jnp.dot(basis.astype(jnp.bfloat16), w0_refs[n_inputs][...],
                       preferred_element_type=jnp.float32)

    h = _mlp_tail(acc, b0_ref, layer_refs)
    out_ref[...] = h.astype(out_ref.dtype)


def fused_mlp(inputs, weights, biases, *, rbf=None, out_dtype=jnp.float32):
    """MLP over concat(inputs [+ bessel(dist)]) without materializing the concat."""
    n_inputs = len(inputs)
    n_layers = len(weights)
    M = int(inputs[0].shape[0])
    k_sizes = [int(x.shape[1]) for x in inputs]
    out_h = int(weights[-1].shape[1])

    row_bytes = sum(k * 2 for k in k_sizes) + (4 if rbf is not None else 0) + out_h * 4
    TM = _choose_tm(M, row_bytes)
    M_pad = _round_up(M, TM)

    def pad_rows(x, dtype):
        x = x.astype(dtype)
        if x.shape[0] == M_pad:
            return x
        return jnp.pad(x, ((0, M_pad - x.shape[0]), (0, 0)))

    args, in_specs = [], []
    for x, k in zip(inputs, k_sizes):
        args.append(pad_rows(x, jnp.bfloat16))
        in_specs.append(pl.BlockSpec((TM, k), lambda i: (i, 0)))
    if rbf is not None:
        dist, freq, cutoff, p = rbf
        nb = int(freq.shape[0])
        dist2d = dist if dist.ndim == 2 else dist.reshape(-1, 1)
        args.append(pad_rows(dist2d, jnp.float32))
        in_specs.append(pl.BlockSpec((TM, 1), lambda i: (i, 0)))
        args.append(freq.reshape(1, nb).astype(jnp.float32))
        in_specs.append(pl.BlockSpec((1, nb), lambda i: (0, 0)))
        rbf_static = (float(cutoff), float(p))
        splits = k_sizes + [nb]
    else:
        rbf_static = None
        splits = list(k_sizes)

    w_args, w_specs, padded_h, w_bytes = _prep_mlp_weight_args(weights, biases, splits)
    args += w_args
    in_specs += w_specs

    streamed = TM * row_bytes
    est = 2 * streamed + 2 * w_bytes + 4 * TM * max(padded_h) + (2 << 20)
    vmem_limit = int(min(max(est, 1 << 20), 48 << 20))   # headroom on v7x's 64 MiB

    out = pl.pallas_call(
        functools.partial(_fused_mlp_kernel, n_inputs, n_layers, rbf_static),
        grid=(M_pad // TM,),
        in_specs=in_specs,
        out_specs=pl.BlockSpec((TM, out_h), lambda i: (i, 0)),
        out_shape=jax.ShapeDtypeStruct((M_pad, out_h), out_dtype),
        compiler_params=pltpu.CompilerParams(
            dimension_semantics=("parallel",),
            vmem_limit_bytes=vmem_limit),
    )(*args)
    return out if M_pad == M else out[:M]


# ------------------- fused message + aggregation kernel -------------------

def _fused_message_agg_kernel(n_layers, rbf, *refs):
    """Per edge tile: gather x_i/x_j, Bessel basis, message MLP, scatter-add."""
    col_ref, colt_ref, row_ref, dist_ref, freq_ref, x_ref = refs[:6]
    idx = 6
    w0_refs = refs[idx:idx + 3]; idx += 3
    b0_ref = refs[idx]; idx += 1
    layer_refs = [(refs[idx + 2 * l], refs[idx + 2 * l + 1])
                  for l in range(n_layers - 1)]
    idx += 2 * (n_layers - 1)
    out_ref = refs[idx]

    TE = col_ref.shape[0]
    Np = x_ref.shape[0]

    # One-hot selectors from edge indices (padded edges carry an out-of-range
    # sentinel -> all-zero rows/columns -> contribute nothing).
    eq_i = col_ref[...] == jax.lax.broadcasted_iota(jnp.int32, (TE, Np), 1)
    eq_j = row_ref[...] == jax.lax.broadcasted_iota(jnp.int32, (TE, Np), 1)
    x = x_ref[...]                                                   # (Np, dim) bf16
    x_i = jnp.dot(eq_i.astype(jnp.bfloat16), x,
                  preferred_element_type=jnp.float32).astype(jnp.bfloat16)  # x[col]
    x_j = jnp.dot(eq_j.astype(jnp.bfloat16), x,
                  preferred_element_type=jnp.float32).astype(jnp.bfloat16)  # x[row]

    cutoff, p = rbf
    acc = jnp.dot(x_i, w0_refs[0][...], preferred_element_type=jnp.float32)
    acc += jnp.dot(x_j, w0_refs[1][...], preferred_element_type=jnp.float32)
    basis = _bessel_basis(dist_ref[...], freq_ref[...], cutoff, p)
    acc += jnp.dot(basis.astype(jnp.bfloat16), w0_refs[2][...],
                   preferred_element_type=jnp.float32)
    m = _mlp_tail(acc, b0_ref, layer_refs)                           # (TE, out_h) f32

    # Scatter-add (segment-sum by target node) as an f32 MXU matmul against the
    # transposed one-hot selector; accumulate into the VMEM-resident output.
    eq_t = colt_ref[...] == jax.lax.broadcasted_iota(jnp.int32, (Np, TE), 0)
    partial = jnp.dot(eq_t.astype(jnp.float32), m,
                      preferred_element_type=jnp.float32)            # (Np, out_h)

    @pl.when(pl.program_id(0) == 0)
    def _():
        out_ref[...] = jnp.zeros_like(out_ref)
    out_ref[...] += partial


def prep_edges(row, col, dist, num_nodes):
    """Loop-invariant edge preprocessing, hoisted out of the layer loop."""
    N = int(num_nodes)
    E = int(row.shape[0])
    Np = _round_up(N, SUB)
    TE = _choose_te(E, Np)
    E_pad = _round_up(max(E, 1), TE)

    def pad_e(v, fill, dtype):
        v = v.astype(dtype)
        if E_pad != E:
            v = jnp.concatenate([v, jnp.full((E_pad - E,), fill, dtype)], axis=0)
        return v

    col_p = pad_e(col, Np, jnp.int32)     # sentinel Np -> all-zero one-hot row/col
    return dict(
        N=N, Np=Np, E=E, E_pad=E_pad, TE=TE,
        col=col_p.reshape(E_pad, 1),
        col_t=col_p.reshape(1, E_pad),
        row=pad_e(row, Np, jnp.int32).reshape(E_pad, 1),
        dist=pad_e(dist, 1.0, jnp.float32).reshape(E_pad, 1),
    )


def fused_message_agg(x, edges, freq, weights, biases, *, cutoff, p):
    """agg = segment_sum(message_mlp(cat[x[col], x[row], bessel(dist)]), col, N)."""
    N, Np, E_pad, TE = edges["N"], edges["Np"], edges["E_pad"], edges["TE"]
    dim = int(x.shape[1])
    nb = int(freq.shape[0])
    n_layers = len(weights)
    out_h = int(weights[-1].shape[1])

    x_p = x.astype(jnp.bfloat16)
    if Np != N:
        x_p = jnp.pad(x_p, ((0, Np - N), (0, 0)))

    args = [edges["col"], edges["col_t"], edges["row"], edges["dist"],
            freq.reshape(1, nb).astype(jnp.float32), x_p]
    in_specs = [
        pl.BlockSpec((TE, 1), lambda i: (i, 0)),      # col (gather ids)
        pl.BlockSpec((1, TE), lambda i: (0, i)),      # col^T (scatter one-hot)
        pl.BlockSpec((TE, 1), lambda i: (i, 0)),      # row
        pl.BlockSpec((TE, 1), lambda i: (i, 0)),      # dist
        pl.BlockSpec((1, nb), lambda i: (0, 0)),      # freq (resident)
        pl.BlockSpec((Np, dim), lambda i: (0, 0)),    # node features (resident)
    ]
    w_args, w_specs, padded_h, w_bytes = _prep_mlp_weight_args(
        weights, biases, [dim, dim, nb])
    args += w_args
    in_specs += w_specs

    streamed = TE * 16                                  # col/col_t/row/dist per tile
    resident = w_bytes + Np * dim * 2 + nb * 4 + Np * out_h * 4
    scratch = 3 * TE * Np * 4 + 4 * TE * max(padded_h + [Np])
    est = 2 * streamed + 2 * resident + scratch + (2 << 20)
    vmem_limit = int(min(max(est, 1 << 20), 48 << 20))

    out = pl.pallas_call(
        functools.partial(_fused_message_agg_kernel, n_layers,
                          (float(cutoff), float(p))),
        grid=(E_pad // TE,),
        in_specs=in_specs,
        out_specs=pl.BlockSpec((Np, out_h), lambda i: (0, 0)),
        out_shape=jax.ShapeDtypeStruct((Np, out_h), jnp.float32),
        compiler_params=pltpu.CompilerParams(
            dimension_semantics=("arbitrary",),        # output accumulated across tiles
            vmem_limit_bytes=vmem_limit),
    )(*args)
    return out if Np == N else out[:N]


# ----------------------------- Parameter init -----------------------------

def _init_linear(key, fan_in, fan_out):
    kw, kb = jax.random.split(key)
    w = jax.random.normal(kw, (fan_in, fan_out), jnp.float32) / math.sqrt(fan_in)
    b = jax.random.normal(kb, (fan_out,), jnp.float32) * 0.01
    return w, b


def _init_mlp(key, dims):
    ws, bs = [], []
    keys = jax.random.split(key, len(dims) - 1)
    for k, (din, dout) in zip(keys, zip(dims[:-1], dims[1:])):
        w, b = _init_linear(k, din, dout)
        ws.append(w)
        bs.append(b)
    return ws, bs


def init_mpnn_params(key, num_types, num_basis, dim, out_dim, depth,
                     message_depth, update_depth, head_depth):
    message_dims = [dim * 2 + num_basis] + [dim] * (message_depth + 1)
    update_dims = [2 * dim] + [dim] * (update_depth + 1)
    head_dims = [dim] * (head_depth + 1) + [out_dim]

    keys = jax.random.split(key, depth * 2 + 2)
    params = {
        "embedding": jax.random.normal(keys[0], (num_types, dim), jnp.float32),
        # BesselBasisLayer freq init: pi * [1, 2, ..., num_radial]
        "freq": jnp.pi * jnp.arange(1, num_basis + 1, dtype=jnp.float32),
        "layers": [],
    }
    for d in range(depth):
        msg_w, msg_b = _init_mlp(keys[1 + 2 * d], message_dims)
        upd_w, upd_b = _init_mlp(keys[2 + 2 * d], update_dims)
        params["layers"].append(
            {"msg_w": msg_w, "msg_b": msg_b, "upd_w": upd_w, "upd_b": upd_b})
    params["head_w"], params["head_b"] = _init_mlp(keys[-1], head_dims)
    return params


# ----------------------------- Forward pass -----------------------------

def mpnn_forward(params, z, pos, edge_index, batch, num_graphs, cutoff,
                 envelope_exponent=5):
    # Embedding lookup (gather glue).
    x = params["embedding"][z]  # [N, dim]

    # Edge distances. PyG convention: row = edge_index[0] (source j),
    # col = edge_index[1] (target i); messages aggregate at targets (col).
    row, col = edge_index[0], edge_index[1]
    dvec = pos[row] - pos[col]
    dist = jnp.sqrt(jnp.sum(dvec * dvec, axis=-1))  # [E]

    freq = params["freq"]
    n_nodes = x.shape[0]

    use_fused_agg = _round_up(n_nodes, SUB) <= FUSE_MAX_NODES
    if use_fused_agg:
        edges = prep_edges(row, col, dist, n_nodes)   # hoisted, loop-invariant
    else:
        dist2d = dist.reshape(-1, 1)                  # hoisted reshape

    for layer in params["layers"]:
        if use_fused_agg:
            # One kernel: gather, message MLP (with in-kernel Bessel basis),
            # and 'add' aggregation by target node.
            agg = fused_message_agg(x, edges, freq, layer["msg_w"], layer["msg_b"],
                                    cutoff=cutoff, p=envelope_exponent)      # [N, dim]
        else:
            # TODO(synk): large-graph fallback keeps XLA gathers + segment_sum.
            x_i = x[col]
            x_j = x[row]
            m = fused_mlp([x_i, x_j], layer["msg_w"], layer["msg_b"],
                          rbf=(dist2d, freq, cutoff, envelope_exponent))     # [E, dim]
            agg = jax.ops.segment_sum(m, col, num_segments=n_nodes)
        # update_net(cat([x, agg])) — K-split first layer, no concat in HBM.
        upd = fused_mlp([x, agg], layer["upd_w"], layer["upd_b"])            # [N, dim]
        x = x + upd  # residual as in MPNN.forward

    # Pooler: global add pool over batch assignment.
    pooled = jax.ops.segment_sum(x, batch, num_segments=num_graphs)          # [B, dim]
    return fused_mlp([pooled], params["head_w"], params["head_b"])           # [B, out_dim]


# ----------------------------- Example run -----------------------------

if __name__ == "__main__":
    # Small, deterministic problem.
    num_types = 5
    num_basis = 8
    cutoff = 5.0
    dim = 32
    out_dim = 4
    depth = 2
    message_depth = 1
    update_depth = 1
    head_depth = 1

    num_graphs = 2
    nodes_per_graph = 8
    N = num_graphs * nodes_per_graph

    key = jax.random.PRNGKey(0)
    kp, kz, kpos = jax.random.split(key, 3)

    params = init_mpnn_params(kp, num_types, num_basis, dim, out_dim, depth,
                              message_depth, update_depth, head_depth)

    z = jax.random.randint(kz, (N,), 0, num_types)
    pos = jax.random.normal(kpos, (N, 3), jnp.float32) * 2.0
    batch = jnp.repeat(jnp.arange(num_graphs), nodes_per_graph)

    # Ring edges within each graph (both directions): E = N * 2 = 32.
    src, dst = [], []
    for g in range(num_graphs):
        base = g * nodes_per_graph
        for i in range(nodes_per_graph):
            j = (i + 1) % nodes_per_graph
            src += [base + i, base + j]
            dst += [base + j, base + i]
    edge_index = jnp.array([src, dst], dtype=jnp.int32)  # [2, E]

    fwd = jax.jit(mpnn_forward, static_argnames=("num_graphs", "cutoff"))
    out = fwd(params, z, pos, edge_index, batch,
              num_graphs=num_graphs, cutoff=cutoff)
    out = jax.block_until_ready(out)
    assert out.shape == (num_graphs, out_dim)
    assert jnp.all(jnp.isfinite(out))

    # Cross-check the fused message+aggregation kernel against the unfused path
    # (fused MLP + XLA segment_sum) on the first layer's parameters.
    x0 = params["embedding"][z]
    row, col = edge_index[0], edge_index[1]
    dist = jnp.sqrt(jnp.sum((pos[row] - pos[col]) ** 2, axis=-1))
    edges = prep_edges(row, col, dist, N)
    agg_fused = fused_message_agg(
        x0, edges, params["freq"],
        params["layers"][0]["msg_w"], params["layers"][0]["msg_b"],
        cutoff=cutoff, p=5)
    m_ref = fused_mlp(
        [x0[col], x0[row]],
        params["layers"][0]["msg_w"], params["layers"][0]["msg_b"],
        rbf=(dist.reshape(-1, 1), params["freq"], cutoff, 5))
    agg_ref = jax.ops.segment_sum(m_ref, col, num_segments=N)
    agg_fused, agg_ref = jax.block_until_ready((agg_fused, agg_ref))
    assert jnp.allclose(agg_fused, agg_ref, rtol=2e-2, atol=2e-2), \
        "fused message+aggregation mismatch vs unfused reference"

    print("KERNEL_OK")
</pallas_src>

<mosaic_0001>
module attributes {stable_mosaic.version = 11 : i64} {
  func.func @_fused_message_agg_kernel(%arg0: i32, %arg1: memref<32x1xi32, #tpu.memory_space<vmem>>, %arg2: memref<1x32xi32, #tpu.memory_space<vmem>>, %arg3: memref<32x1xi32, #tpu.memory_space<vmem>>, %arg4: memref<32x1xf32, #tpu.memory_space<vmem>>, %arg5: memref<1x8xf32, #tpu.memory_space<vmem>>, %arg6: memref<16x32xbf16, #tpu.memory_space<vmem>>, %arg7: memref<32x128xbf16, #tpu.memory_space<vmem>>, %arg8: memref<32x128xbf16, #tpu.memory_space<vmem>>, %arg9: memref<8x128xbf16, #tpu.memory_space<vmem>>, %arg10: memref<1x128xf32, #tpu.memory_space<vmem>>, %arg11: memref<128x32xbf16, #tpu.memory_space<vmem>>, %arg12: memref<1x32xf32, #tpu.memory_space<vmem>>, %arg13: memref<16x32xf32, #tpu.memory_space<vmem>>) attributes {dimension_semantics = [#tpu.dimension_semantics<arbitrary>], iteration_bounds = array<i64: 1>, scalar_prefetch = 0 : i64, scratch_operands = 0 : i64, tpu.core_type = #tpu.core_type<tc>, window_params = [{transform_indices = @transform_0, window_bounds = array<i64: 32, 1>}, {transform_indices = @transform_1, window_bounds = array<i64: 1, 32>}, {transform_indices = @transform_2, window_bounds = array<i64: 32, 1>}, {transform_indices = @transform_3, window_bounds = array<i64: 32, 1>}, {pipeline_mode = #tpu.pipeline_mode<synchronous>, transform_indices = @transform_4, window_bounds = array<i64: 1, 8>}, {pipeline_mode = #tpu.pipeline_mode<synchronous>, transform_indices = @transform_5, window_bounds = array<i64: 16, 32>}, {pipeline_mode = #tpu.pipeline_mode<synchronous>, transform_indices = @transform_6, window_bounds = array<i64: 32, 128>}, {pipeline_mode = #tpu.pipeline_mode<synchronous>, transform_indices = @transform_7, window_bounds = array<i64: 32, 128>}, {pipeline_mode = #tpu.pipeline_mode<synchronous>, transform_indices = @transform_8, window_bounds = array<i64: 8, 128>}, {pipeline_mode = #tpu.pipeline_mode<synchronous>, transform_indices = @transform_9, window_bounds = array<i64: 1, 128>}, {pipeline_mode = #tpu.pipeline_mode<synchronous>, transform_indices = @transform_10, window_bounds = array<i64: 128, 32>}, {pipeline_mode = #tpu.pipeline_mode<synchronous>, transform_indices = @transform_11, window_bounds = array<i64: 1, 32>}, {pipeline_mode = #tpu.pipeline_mode<synchronous>, transform_indices = @transform_12, window_bounds = array<i64: 16, 32>}]} {
    %c0 = arith.constant 0 : index
    %c0_0 = arith.constant 0 : index
    %0 = vector.load %arg1[%c0, %c0_0] : memref<32x1xi32, #tpu.memory_space<vmem>>, vector<32x1xi32>
    %1 = tpu.iota {dimensions = array<i32: 1>} : vector<32x16xi32>
    %2 = vector.broadcast %0 : vector<32x1xi32> to vector<32x16xi32>
    %3 = arith.cmpi eq, %2, %1 : vector<32x16xi32>
    %c0_1 = arith.constant 0 : index
    %c0_2 = arith.constant 0 : index
    %4 = vector.load %arg3[%c0_1, %c0_2] : memref<32x1xi32, #tpu.memory_space<vmem>>, vector<32x1xi32>
    %5 = tpu.iota {dimensions = array<i32: 1>} : vector<32x16xi32>
    %6 = vector.broadcast %4 : vector<32x1xi32> to vector<32x16xi32>
    %7 = arith.cmpi eq, %6, %5 : vector<32x16xi32>
    %c0_3 = arith.constant 0 : index
    %c0_4 = arith.constant 0 : index
    %8 = vector.load %arg6[%c0_3, %c0_4] : memref<16x32xbf16, #tpu.memory_space<vmem>>, vector<16x32xbf16>
    %9 = arith.extui %3 : vector<32x16xi1> to vector<32x16xi32>
    %10 = arith.sitofp %9 : vector<32x16xi32> to vector<32x16xf32>
    %11 = arith.truncf %10 : vector<32x16xf32> to vector<32x16xbf16>
    %cst = arith.constant dense<0.000000e+00> : vector<32x32xf32>
    %12 = tpu.matmul %11, %8, %cst {dimension_numbers = #tpu.dot_dimension_numbers<[1], [0], [0], [1], [0, 0, 1, 1], [], []>} : vector<32x16xbf16>, vector<16x32xbf16>, vector<32x32xf32> -> vector<32x32xf32>
    %13 = arith.truncf %12 : vector<32x32xf32> to vector<32x32xbf16>
    %14 = arith.extui %7 : vector<32x16xi1> to vector<32x16xi32>
    %15 = arith.sitofp %14 : vector<32x16xi32> to vector<32x16xf32>
    %16 = arith.truncf %15 : vector<32x16xf32> to vector<32x16xbf16>
    %cst_5 = arith.constant dense<0.000000e+00> : vector<32x32xf32>
    %17 = tpu.matmul %16, %8, %cst_5 {dimension_numbers = #tpu.dot_dimension_numbers<[1], [0], [0], [1], [0, 0, 1, 1], [], []>} : vector<32x16xbf16>, vector<16x32xbf16>, vector<32x32xf32> -> vector<32x32xf32>
    %18 = arith.truncf %17 : vector<32x32xf32> to vector<32x32xbf16>
    %c0_6 = arith.constant 0 : index
    %c0_7 = arith.constant 0 : index
    %19 = vector.load %arg7[%c0_6, %c0_7] : memref<32x128xbf16, #tpu.memory_space<vmem>>, vector<32x128xbf16>
    %cst_8 = arith.constant dense<0.000000e+00> : vector<32x128xf32>
    %20 = tpu.matmul %13, %19, %cst_8 {dimension_numbers = #tpu.dot_dimension_numbers<[1], [0], [0], [1], [0, 0, 1, 1], [], []>} : vector<32x32xbf16>, vector<32x128xbf16>, vector<32x128xf32> -> vector<32x128xf32>
    %c0_9 = arith.constant 0 : index
    %c0_10 = arith.constant 0 : index
    %21 = vector.load %arg8[%c0_9, %c0_10] : memref<32x128xbf16, #tpu.memory_space<vmem>>, vector<32x128xbf16>
    %cst_11 = arith.constant dense<0.000000e+00> : vector<32x128xf32>
    %22 = tpu.matmul %18, %21, %cst_11 {dimension_numbers = #tpu.dot_dimension_numbers<[1], [0], [0], [1], [0, 0, 1, 1], [], []>} : vector<32x32xbf16>, vector<32x128xbf16>, vector<32x128xf32> -> vector<32x128xf32>
    %23 = arith.addf %20, %22 : vector<32x128xf32>
    %c0_12 = arith.constant 0 : index
    %c0_13 = arith.constant 0 : index
    %24 = vector.load %arg4[%c0_12, %c0_13] : memref<32x1xf32, #tpu.memory_space<vmem>>, vector<32x1xf32>
    %c0_14 = arith.constant 0 : index
    %c0_15 = arith.constant 0 : index
    %25 = vector.load %arg5[%c0_14, %c0_15] : memref<1x8xf32, #tpu.memory_space<vmem>>, vector<1x8xf32>
    %cst_16 = arith.constant 2.000000e-01 : f32
    %26 = vector.broadcast %cst_16 : f32 to vector<32x1xf32>
    %27 = arith.mulf %24, %26 : vector<32x1xf32>
    %cst_17 = arith.constant 9.99999996E-13 : f32
    %28 = vector.broadcast %cst_17 : f32 to vector<32x1xf32>
    %29 = arith.cmpf ogt, %27, %28 : vector<32x1xf32>
    %cst_18 = arith.constant 1.000000e+00 : f32
    %30 = vector.broadcast %cst_18 : f32 to vector<32x1xf32>
    %31 = arith.select %29, %27, %30 : vector<32x1xi1>, vector<32x1xf32>
    %32 = tpu.reciprocal %31 : vector<32x1xf32> -> vector<32x1xf32>
    %33 = arith.mulf %31, %31 : vector<32x1xf32>
    %34 = arith.mulf %33, %33 : vector<32x1xf32>
    %35 = arith.mulf %34, %31 : vector<32x1xf32>
    %36 = arith.mulf %35, %31 : vector<32x1xf32>
    %cst_19 = arith.constant -2.100000e+01 : f32
    %37 = vector.broadcast %cst_19 : f32 to vector<32x1xf32>
    %38 = arith.mulf %37, %34 : vector<32x1xf32>
    %39 = arith.addf %32, %38 : vector<32x1xf32>
    %cst_20 = arith.constant 3.500000e+01 : f32
    %40 = vector.broadcast %cst_20 : f32 to vector<32x1xf32>
    %41 = arith.mulf %40, %35 : vector<32x1xf32>
    %42 = arith.addf %39, %41 : vector<32x1xf32>
    %cst_21 = arith.constant -1.500000e+01 : f32
    %43 = vector.broadcast %cst_21 : f32 to vector<32x1xf32>
    %44 = arith.mulf %43, %36 : vector<32x1xf32>
    %45 = arith.addf %42, %44 : vector<32x1xf32>
    %46 = vector.broadcast %25 : vector<1x8xf32> to vector<32x8xf32>
    %47 = vector.broadcast %31 : vector<32x1xf32> to vector<32x8xf32>
    %48 = arith.mulf %46, %47 : vector<32x8xf32>
    %49 = math.sin %48 : vector<32x8xf32>
    %50 = vector.broadcast %45 : vector<32x1xf32> to vector<32x8xf32>
    %51 = arith.mulf %50, %49 : vector<32x8xf32>
    %cst_22 = arith.constant 0.000000e+00 : f32
    %52 = vector.shape_cast %29 : vector<32x1xi1> to vector<32x1xi1>
    %53 = vector.broadcast %52 : vector<32x1xi1> to vector<32x8xi1>
    %54 = vector.broadcast %cst_22 : f32 to vector<32x8xf32>
    %55 = arith.select %53, %51, %54 : vector<32x8xi1>, vector<32x8xf32>
    %56 = arith.truncf %55 : vector<32x8xf32> to vector<32x8xbf16>
    %c0_23 = arith.constant 0 : index
    %c0_24 = arith.constant 0 : index
    %57 = vector.load %arg9[%c0_23, %c0_24] : memref<8x128xbf16, #tpu.memory_space<vmem>>, vector<8x128xbf16>
    %cst_25 = arith.constant dense<0.000000e+00> : vector<32x128xf32>
    %58 = tpu.matmul %56, %57, %cst_25 {dimension_numbers = #tpu.dot_dimension_numbers<[1], [0], [0], [1], [0, 0, 1, 1], [], []>} : vector<32x8xbf16>, vector<8x128xbf16>, vector<32x128xf32> -> vector<32x128xf32>
    %59 = arith.addf %23, %58 : vector<32x128xf32>
    %c0_26 = arith.constant 0 : index
    %c0_27 = arith.constant 0 : index
    %60 = vector.load %arg10[%c0_26, %c0_27] : memref<1x128xf32, #tpu.memory_space<vmem>>, vector<1x128xf32>
    %61 = vector.broadcast %60 : vector<1x128xf32> to vector<32x128xf32>
    %62 = arith.addf %59, %61 : vector<32x128xf32>
    %63 = arith.negf %62 : vector<32x128xf32>
    %64 = math.exp %63 : vector<32x128xf32>
    %cst_28 = arith.constant 1.000000e+00 : f32
    %65 = vector.broadcast %cst_28 : f32 to vector<32x128xf32>
    %66 = arith.addf %65, %64 : vector<32x128xf32>
    %67 = arith.divf %65, %66 : vector<32x128xf32>
    %68 = arith.mulf %62, %67 : vector<32x128xf32>
    %69 = arith.truncf %68 : vector<32x128xf32> to vector<32x128xbf16>
    %c0_29 = arith.constant 0 : index
    %c0_30 = arith.constant 0 : index
    %70 = vector.load %arg11[%c0_29, %c0_30] : memref<128x32xbf16, #tpu.memory_space<vmem>>, vector<128x32xbf16>
    %cst_31 = arith.constant dense<0.000000e+00> : vector<32x32xf32>
    %71 = tpu.matmul %69, %70, %cst_31 {dimension_numbers = #tpu.dot_dimension_numbers<[1], [0], [0], [1], [0, 0, 1, 1], [], []>} : vector<32x128xbf16>, vector<128x32xbf16>, vector<32x32xf32> -> vector<32x32xf32>
    %c0_32 = arith.constant 0 : index
    %c0_33 = arith.constant 0 : index
    %72 = vector.load %arg12[%c0_32, %c0_33] : memref<1x32xf32, #tpu.memory_space<vmem>>, vector<1x32xf32>
    %73 = vector.broadcast %72 : vector<1x32xf32> to vector<32x32xf32>
    %74 = arith.addf %71, %73 : vector<32x32xf32>
    %c0_34 = arith.constant 0 : index
    %c0_35 = arith.constant 0 : index
    %75 = vector.load %arg2[%c0_34, %c0_35] : memref<1x32xi32, #tpu.memory_space<vmem>>, vector<1x32xi32>
    %76 = tpu.iota {dimensions = array<i32: 0>} : vector<16x32xi32>
    %77 = vector.broadcast %75 : vector<1x32xi32> to vector<16x32xi32>
    %78 = arith.cmpi eq, %77, %76 : vector<16x32xi32>
    %79 = arith.extui %78 : vector<16x32xi1> to vector<16x32xi32>
    %80 = arith.sitofp %79 : vector<16x32xi32> to vector<16x32xf32>
    %cst_36 = arith.constant dense<0.000000e+00> : vector<16x32xf32>
    %81 = tpu.matmul %80, %74, %cst_36 {dimension_numbers = #tpu.dot_dimension_numbers<[1], [0], [0], [1], [0, 0, 1, 1], [], []>} : vector<16x32xf32>, vector<32x32xf32>, vector<16x32xf32> -> vector<16x32xf32>
    %c0_i32 = arith.constant 0 : i32
    %82 = arith.cmpi eq, %arg0, %c0_i32 : i32
    %83 = arith.extui %82 : i1 to i32
    %c0_i32_37 = arith.constant 0 : i32
    %84 = arith.cmpi ne, %83, %c0_i32_37 : i32
    scf.if %84 {
      %cst_42 = arith.constant 0.000000e+00 : f32
      %88 = vector.broadcast %cst_42 : f32 to vector<16x32xf32>
      %c0_43 = arith.constant 0 : index
      %c0_44 = arith.constant 0 : index
      %89 = vector.load %arg13[%c0_43, %c0_44] : memref<16x32xf32, #tpu.memory_space<vmem>>, vector<16x32xf32>
      tpu.vector_store %arg13[%c0_43, %c0_44], %88 {strides = array<i32>} : memref<16x32xf32, #tpu.memory_space<vmem>>, vector<16x32xf32>,
    } else {
    }
    %c0_38 = arith.constant 0 : index
    %c0_39 = arith.constant 0 : index
    %85 = vector.load %arg13[%c0_38, %c0_39] : memref<16x32xf32, #tpu.memory_space<vmem>>, vector<16x32xf32>
    %86 = arith.addf %85, %81 : vector<16x32xf32>
    %c0_40 = arith.constant 0 : index
    %c0_41 = arith.constant 0 : index
    %87 = vector.load %arg13[%c0_40, %c0_41] : memref<16x32xf32, #tpu.memory_space<vmem>>, vector<16x32xf32>
    tpu.vector_store %arg13[%c0_40, %c0_41], %86 {strides = array<i32>} : memref<16x32xf32, #tpu.memory_space<vmem>>, vector<16x32xf32>,
    return
  }
  func.func @transform_0(%arg0: i32) -> (i32, i32) {
    %c0_i32 = arith.constant 0 : i32
    %c0_i32_0 = arith.constant 0 : i32
    return %arg0, %c0_i32 : i32, i32
  }
  func.func @transform_1(%arg0: i32) -> (i32, i32) {
    %c0_i32 = arith.constant 0 : i32
    %c0_i32_0 = arith.constant 0 : i32
    return %c0_i32, %arg0 : i32, i32
  }
  func.func @transform_2(%arg0: i32) -> (i32, i32) {
    %c0_i32 = arith.constant 0 : i32
    %c0_i32_0 = arith.constant 0 : i32
    return %arg0, %c0_i32 : i32, i32
  }
  func.func @transform_3(%arg0: i32) -> (i32, i32) {
    %c0_i32 = arith.constant 0 : i32
    %c0_i32_0 = arith.constant 0 : i32
    return %arg0, %c0_i32 : i32, i32
  }
  func.func @transform_4(%arg0: i32) -> (i32, i32) {
    %c0_i32 = arith.constant 0 : i32
    %c0_i32_0 = arith.constant 0 : i32
    %c0_i32_1 = arith.constant 0 : i32
    return %c0_i32, %c0_i32_0 : i32, i32
  }
  func.func @transform_5(%arg0: i32) -> (i32, i32) {
    %c0_i32 = arith.constant 0 : i32
    %c0_i32_0 = arith.constant 0 : i32
    %c0_i32_1 = arith.constant 0 : i32
    return %c0_i32, %c0_i32_0 : i32, i32
  }
  func.func @transform_6(%arg0: i32) -> (i32, i32) {
    %c0_i32 = arith.constant 0 : i32
    %c0_i32_0 = arith.constant 0 : i32
    %c0_i32_1 = arith.constant 0 : i32
    return %c0_i32, %c0_i32_0 : i32, i32
  }
  func.func @transform_7(%arg0: i32) -> (i32, i32) {
    %c0_i32 = arith.constant 0 : i32
    %c0_i32_0 = arith.constant 0 : i32
    %c0_i32_1 = arith.constant 0 : i32
    return %c0_i32, %c0_i32_0 : i32, i32
  }
  func.func @transform_8(%arg0: i32) -> (i32, i32) {
    %c0_i32 = arith.constant 0 : i32
    %c0_i32_0 = arith.constant 0 : i32
    %c0_i32_1 = arith.constant 0 : i32
    return %c0_i32, %c0_i32_0 : i32, i32
  }
  func.func @transform_9(%arg0: i32) -> (i32, i32) {
    %c0_i32 = arith.constant 0 : i32
    %c0_i32_0 = arith.constant 0 : i32
    %c0_i32_1 = arith.constant 0 : i32
    return %c0_i32, %c0_i32_0 : i32, i32
  }
  func.func @transform_10(%arg0: i32) -> (i32, i32) {
    %c0_i32 = arith.constant 0 : i32
    %c0_i32_0 = arith.constant 0 : i32
    %c0_i32_1 = arith.constant 0 : i32
    return %c0_i32, %c0_i32_0 : i32, i32
  }
  func.func @transform_11(%arg0: i32) -> (i32, i32) {
    %c0_i32 = arith.constant 0 : i32
    %c0_i32_0 = arith.constant 0 : i32
    %c0_i32_1 = arith.constant 0 : i32
    return %c0_i32, %c0_i32_0 : i32, i32
  }
  func.func @transform_12(%arg0: i32) -> (i32, i32) {
    %c0_i32 = arith.constant 0 : i32
    %c0_i32_0 = arith.constant 0 : i32
    %c0_i32_1 = arith.constant 0 : i32
    return %c0_i32, %c0_i32_0 : i32, i32
  }
}

module attributes {stable_mosaic.version = 11 : i64} {
  func.func @_fused_mlp_kernel(%arg0: i32, %arg1: memref<16x32xbf16, #tpu.memory_space<vmem>>, %arg2: memref<16x32xbf16, #tpu.memory_space<vmem>>, %arg3: memref<32x128xbf16, #tpu.memory_space<vmem>>, %arg4: memref<32x128xbf16, #tpu.memory_space<vmem>>, %arg5: memref<1x128xf32, #tpu.memory_space<vmem>>, %arg6: memref<128x32xbf16, #tpu.memory_space<vmem>>, %arg7: memref<1x32xf32, #tpu.memory_space<vmem>>, %arg8: memref<16x32xf32, #tpu.memory_space<vmem>>) attributes {dimension_semantics = [#tpu.dimension_semantics<parallel>], iteration_bounds = array<i64: 1>, scalar_prefetch = 0 : i64, scratch_operands = 0 : i64, tpu.core_type = #tpu.core_type<tc>, window_params = [{transform_indices = @transform_0, window_bounds = array<i64: 16, 32>}, {transform_indices = @transform_1, window_bounds = array<i64: 16, 32>}, {pipeline_mode = #tpu.pipeline_mode<synchronous>, transform_indices = @transform_2, window_bounds = array<i64: 32, 128>}, {pipeline_mode = #tpu.pipeline_mode<synchronous>, transform_indices = @transform_3, window_bounds = array<i64: 32, 128>}, {pipeline_mode = #tpu.pipeline_mode<synchronous>, transform_indices = @transform_4, window_bounds = array<i64: 1, 128>}, {pipeline_mode = #tpu.pipeline_mode<synchronous>, transform_indices = @transform_5, window_bounds = array<i64: 128, 32>}, {pipeline_mode = #tpu.pipeline_mode<synchronous>, transform_indices = @transform_6, window_bounds = array<i64: 1, 32>}, {transform_indices = @transform_7, window_bounds = array<i64: 16, 32>}]} {
    %c0 = arith.constant 0 : index
    %c0_0 = arith.constant 0 : index
    %0 = vector.load %arg1[%c0, %c0_0] : memref<16x32xbf16, #tpu.memory_space<vmem>>, vector<16x32xbf16>
    %c0_1 = arith.constant 0 : index
    %c0_2 = arith.constant 0 : index
    %1 = vector.load %arg3[%c0_1, %c0_2] : memref<32x128xbf16, #tpu.memory_space<vmem>>, vector<32x128xbf16>
    %cst = arith.constant dense<0.000000e+00> : vector<16x128xf32>
    %2 = tpu.matmul %0, %1, %cst {dimension_numbers = #tpu.dot_dimension_numbers<[1], [0], [0], [1], [0, 0, 1, 1], [], []>} : vector<16x32xbf16>, vector<32x128xbf16>, vector<16x128xf32> -> vector<16x128xf32>
    %c0_3 = arith.constant 0 : index
    %c0_4 = arith.constant 0 : index
    %3 = vector.load %arg2[%c0_3, %c0_4] : memref<16x32xbf16, #tpu.memory_space<vmem>>, vector<16x32xbf16>
    %c0_5 = arith.constant 0 : index
    %c0_6 = arith.constant 0 : index
    %4 = vector.load %arg4[%c0_5, %c0_6] : memref<32x128xbf16, #tpu.memory_space<vmem>>, vector<32x128xbf16>
    %cst_7 = arith.constant dense<0.000000e+00> : vector<16x128xf32>
    %5 = tpu.matmul %3, %4, %cst_7 {dimension_numbers = #tpu.dot_dimension_numbers<[1], [0], [0], [1], [0, 0, 1, 1], [], []>} : vector<16x32xbf16>, vector<32x128xbf16>, vector<16x128xf32> -> vector<16x128xf32>
    %6 = arith.addf %2, %5 : vector<16x128xf32>
    %c0_8 = arith.constant 0 : index
    %c0_9 = arith.constant 0 : index
    %7 = vector.load %arg5[%c0_8, %c0_9] : memref<1x128xf32, #tpu.memory_space<vmem>>, vector<1x128xf32>
    %8 = vector.broadcast %7 : vector<1x128xf32> to vector<16x128xf32>
    %9 = arith.addf %6, %8 : vector<16x128xf32>
    %10 = arith.negf %9 : vector<16x128xf32>
    %11 = math.exp %10 : vector<16x128xf32>
    %cst_10 = arith.constant 1.000000e+00 : f32
    %12 = vector.broadcast %cst_10 : f32 to vector<16x128xf32>
    %13 = arith.addf %12, %11 : vector<16x128xf32>
    %14 = arith.divf %12, %13 : vector<16x128xf32>
    %15 = arith.mulf %9, %14 : vector<16x128xf32>
    %16 = arith.truncf %15 : vector<16x128xf32> to vector<16x128xbf16>
    %c0_11 = arith.constant 0 : index
    %c0_12 = arith.constant 0 : index
    %17 = vector.load %arg6[%c0_11, %c0_12] : memref<128x32xbf16, #tpu.memory_space<vmem>>, vector<128x32xbf16>
    %cst_13 = arith.constant dense<0.000000e+00> : vector<16x32xf32>
    %18 = tpu.matmul %16, %17, %cst_13 {dimension_numbers = #tpu.dot_dimension_numbers<[1], [0], [0], [1], [0, 0, 1, 1], [], []>} : vector<16x128xbf16>, vector<128x32xbf16>, vector<16x32xf32> -> vector<16x32xf32>
    %c0_14 = arith.constant 0 : index
    %c0_15 = arith.constant 0 : index
    %19 = vector.load %arg7[%c0_14, %c0_15] : memref<1x32xf32, #tpu.memory_space<vmem>>, vector<1x32xf32>
    %20 = vector.broadcast %19 : vector<1x32xf32> to vector<16x32xf32>
    %21 = arith.addf %18, %20 : vector<16x32xf32>
    %c0_16 = arith.constant 0 : index
    %c0_17 = arith.constant 0 : index
    %22 = vector.load %arg8[%c0_16, %c0_17] : memref<16x32xf32, #tpu.memory_space<vmem>>, vector<16x32xf32>
    tpu.vector_store %arg8[%c0_16, %c0_17], %21 {strides = array<i32>} : memref<16x32xf32, #tpu.memory_space<vmem>>, vector<16x32xf32>,
    return
  }
  func.func @transform_0(%arg0: i32) -> (i32, i32) {
    %c0_i32 = arith.constant 0 : i32
    %c0_i32_0 = arith.constant 0 : i32
    return %arg0, %c0_i32 : i32, i32
  }
  func.func @transform_1(%arg0: i32) -> (i32, i32) {
    %c0_i32 = arith.constant 0 : i32
    %c0_i32_0 = arith.constant 0 : i32
    return %arg0, %c0_i32 : i32, i32
  }
  func.func @transform_2(%arg0: i32) -> (i32, i32) {
    %c0_i32 = arith.constant 0 : i32
    %c0_i32_0 = arith.constant 0 : i32
    %c0_i32_1 = arith.constant 0 : i32
    return %c0_i32, %c0_i32_0 : i32, i32
  }
  func.func @transform_3(%arg0: i32) -> (i32, i32) {
    %c0_i32 = arith.constant 0 : i32
    %c0_i32_0 = arith.constant 0 : i32
    %c0_i32_1 = arith.constant 0 : i32
    return %c0_i32, %c0_i32_0 : i32, i32
  }
  func.func @transform_4(%arg0: i32) -> (i32, i32) {
    %c0_i32 = arith.constant 0 : i32
    %c0_i32_0 = arith.constant 0 : i32
    %c0_i32_1 = arith.constant 0 : i32
    return %c0_i32, %c0_i32_0 : i32, i32
  }
  func.func @transform_5(%arg0: i32) -> (i32, i32) {
    %c0_i32 = arith.constant 0 : i32
    %c0_i32_0 = arith.constant 0 : i32
    %c0_i32_1 = arith.constant 0 : i32
    return %c0_i32, %c0_i32_0 : i32, i32
  }
  func.func @transform_6(%arg0: i32) -> (i32, i32) {
    %c0_i32 = arith.constant 0 : i32
    %c0_i32_0 = arith.constant 0 : i32
    %c0_i32_1 = arith.constant 0 : i32
    return %c0_i32, %c0_i32_0 : i32, i32
  }
  func.func @transform_7(%arg0: i32) -> (i32, i32) {
    %c0_i32 = arith.constant 0 : i32
    %c0_i32_0 = arith.constant 0 : i32
    return %arg0, %c0_i32 : i32, i32
  }
}

module attributes {stable_mosaic.version = 11 : i64} {
  func.func @_fused_mlp_kernel(%arg0: i32, %arg1: memref<8x32xbf16, #tpu.memory_space<vmem>>, %arg2: memref<32x128xbf16, #tpu.memory_space<vmem>>, %arg3: memref<1x128xf32, #tpu.memory_space<vmem>>, %arg4: memref<128x4xbf16, #tpu.memory_space<vmem>>, %arg5: memref<1x4xf32, #tpu.memory_space<vmem>>, %arg6: memref<8x4xf32, #tpu.memory_space<vmem>>) attributes {dimension_semantics = [#tpu.dimension_semantics<parallel>], iteration_bounds = array<i64: 1>, scalar_prefetch = 0 : i64, scratch_operands = 0 : i64, tpu.core_type = #tpu.core_type<tc>, window_params = [{transform_indices = @transform_0, window_bounds = array<i64: 8, 32>}, {pipeline_mode = #tpu.pipeline_mode<synchronous>, transform_indices = @transform_1, window_bounds = array<i64: 32, 128>}, {pipeline_mode = #tpu.pipeline_mode<synchronous>, transform_indices = @transform_2, window_bounds = array<i64: 1, 128>}, {pipeline_mode = #tpu.pipeline_mode<synchronous>, transform_indices = @transform_3, window_bounds = array<i64: 128, 4>}, {pipeline_mode = #tpu.pipeline_mode<synchronous>, transform_indices = @transform_4, window_bounds = array<i64: 1, 4>}, {transform_indices = @transform_5, window_bounds = array<i64: 8, 4>}]} {
    %c0 = arith.constant 0 : index
    %c0_0 = arith.constant 0 : index
    %0 = vector.load %arg1[%c0, %c0_0] : memref<8x32xbf16, #tpu.memory_space<vmem>>, vector<8x32xbf16>
    %c0_1 = arith.constant 0 : index
    %c0_2 = arith.constant 0 : index
    %1 = vector.load %arg2[%c0_1, %c0_2] : memref<32x128xbf16, #tpu.memory_space<vmem>>, vector<32x128xbf16>
    %cst = arith.constant dense<0.000000e+00> : vector<8x128xf32>
    %2 = tpu.matmul %0, %1, %cst {dimension_numbers = #tpu.dot_dimension_numbers<[1], [0], [0], [1], [0, 0, 1, 1], [], []>} : vector<8x32xbf16>, vector<32x128xbf16>, vector<8x128xf32> -> vector<8x128xf32>
    %c0_3 = arith.constant 0 : index
    %c0_4 = arith.constant 0 : index
    %3 = vector.load %arg3[%c0_3, %c0_4] : memref<1x128xf32, #tpu.memory_space<vmem>>, vector<1x128xf32>
    %4 = vector.broadcast %3 : vector<1x128xf32> to vector<8x128xf32>
    %5 = arith.addf %2, %4 : vector<8x128xf32>
    %6 = arith.negf %5 : vector<8x128xf32>
    %7 = math.exp %6 : vector<8x128xf32>
    %cst_5 = arith.constant 1.000000e+00 : f32
    %8 = vector.broadcast %cst_5 : f32 to vector<8x128xf32>
    %9 = arith.addf %8, %7 : vector<8x128xf32>
    %10 = arith.divf %8, %9 : vector<8x128xf32>
    %11 = arith.mulf %5, %10 : vector<8x128xf32>
    %12 = arith.truncf %11 : vector<8x128xf32> to vector<8x128xbf16>
    %c0_6 = arith.constant 0 : index
    %c0_7 = arith.constant 0 : index
    %13 = vector.load %arg4[%c0_6, %c0_7] : memref<128x4xbf16, #tpu.memory_space<vmem>>, vector<128x4xbf16>
    %cst_8 = arith.constant dense<0.000000e+00> : vector<8x4xf32>
    %14 = tpu.matmul %12, %13, %cst_8 {dimension_numbers = #tpu.dot_dimension_numbers<[1], [0], [0], [1], [0, 0, 1, 1], [], []>} : vector<8x128xbf16>, vector<128x4xbf16>, vector<8x4xf32> -> vector<8x4xf32>
    %c0_9 = arith.constant 0 : index
    %c0_10 = arith.constant 0 : index
    %15 = vector.load %arg5[%c0_9, %c0_10] : memref<1x4xf32, #tpu.memory_space<vmem>>, vector<1x4xf32>
    %16 = vector.broadcast %15 : vector<1x4xf32> to vector<8x4xf32>
    %17 = arith.addf %14, %16 : vector<8x4xf32>
    %c0_11 = arith.constant 0 : index
    %c0_12 = arith.constant 0 : index
    %18 = vector.load %arg6[%c0_11, %c0_12] : memref<8x4xf32, #tpu.memory_space<vmem>>, vector<8x4xf32>
    tpu.vector_store %arg6[%c0_11, %c0_12], %17 {strides = array<i32>} : memref<8x4xf32, #tpu.memory_space<vmem>>, vector<8x4xf32>,
    return
  }
  func.func @transform_0(%arg0: i32) -> (i32, i32) {
    %c0_i32 = arith.constant 0 : i32
    %c0_i32_0 = arith.constant 0 : i32
    return %arg0, %c0_i32 : i32, i32
  }
  func.func @transform_1(%arg0: i32) -> (i32, i32) {
    %c0_i32 = arith.constant 0 : i32
    %c0_i32_0 = arith.constant 0 : i32
    %c0_i32_1 = arith.constant 0 : i32
    return %c0_i32, %c0_i32_0 : i32, i32
  }
  func.func @transform_2(%arg0: i32) -> (i32, i32) {
    %c0_i32 = arith.constant 0 : i32
    %c0_i32_0 = arith.constant 0 : i32
    %c0_i32_1 = arith.constant 0 : i32
    return %c0_i32, %c0_i32_0 : i32, i32
  }
  func.func @transform_3(%arg0: i32) -> (i32, i32) {
    %c0_i32 = arith.constant 0 : i32
    %c0_i32_0 = arith.constant 0 : i32
    %c0_i32_1 = arith.constant 0 : i32
    return %c0_i32, %c0_i32_0 : i32, i32
  }
  func.func @transform_4(%arg0: i32) -> (i32, i32) {
    %c0_i32 = arith.constant 0 : i32
    %c0_i32_0 = arith.constant 0 : i32
    %c0_i32_1 = arith.constant 0 : i32
    return %c0_i32, %c0_i32_0 : i32, i32
  }
  func.func @transform_5(%arg0: i32) -> (i32, i32) {
    %c0_i32 = arith.constant 0 : i32
    %c0_i32_0 = arith.constant 0 : i32
    return %arg0, %c0_i32 : i32, i32
  }
}

</mosaic_0001>

<llo_original>
// kernel: mpnn_forward.6
$region0: #{mpnn_forward.6}
  #allocation0 [shape = 'u32[]', space=smem, size = 0x4, offset = 0x4, fixed_abs, tag = 'smem constant byte address 0x4 - core index']
  #allocation1 [shape = 'u32[144,128]{1,0:T(1,128)}', space=vmem, size = 0x12000, scoped, tag = 'internal scratch']
  %s0 = inlined_call_operand.vmem [shape: bf16[16,32], index: 0, kind: input, shape index: {}]
  %s1 = inlined_call_operand.vmem [shape: bf16[16,32], index: 1, kind: input, shape index: {}]
  %s2 = inlined_call_operand.vmem [shape: bf16[32,128], index: 2, kind: input, shape index: {}]
  %s3 = inlined_call_operand.vmem [shape: bf16[32,128], index: 3, kind: input, shape index: {}]
  %s4 = inlined_call_operand.vmem [shape: f32[1,128], index: 4, kind: input, shape index: {}]
  %s5 = inlined_call_operand.vmem [shape: bf16[128,32], index: 5, kind: input, shape index: {}]
  %s6 = inlined_call_operand.vmem [shape: f32[1,32], index: 6, kind: input, shape index: {}]
  %s7 = inlined_call_operand.vmem [shape: f32[16,32], index: 7, kind: output, shape index: {}]
  %s8 = sld [smem:[#allocation0]]
  $region38: #{mpnn_forward.6} parent=0
    _
  %s10 = ssub.s32 1, %s8
  %s11 = scalar_select 0, %s10, %s8
  // Predicated region
  $region2: #{mpnn_forward.6} parent=0 // pred_check
    _
  $region3: #{mpnn_forward.6} parent=0 // pred_check_branch
    %13 = sbr.rel (0) target = $region5
  $region4: #{mpnn_forward.6} parent=0 // pred_region
    _
  $region5: #{mpnn_forward.6} parent=0 // pred_fallthru
    _
  // Predicated region
  $region6: #{mpnn_forward.6} parent=0 // pred_check
    _
  $region7: #{mpnn_forward.6} parent=0 // pred_check_branch
    %15 = sbr.rel (0) target = $region9
  $region8: #{mpnn_forward.6} parent=0 // pred_region
    _
  $region9: #{mpnn_forward.6} parent=0 // pred_fallthru
    _
  // Predicated region
  $region10: #{mpnn_forward.6} parent=0 // pred_check
    _
  $region11: #{mpnn_forward.6} parent=0 // pred_check_branch
    %17 = sbr.rel (0) target = $region13
  $region12: #{mpnn_forward.6} parent=0 // pred_region
    _
  $region13: #{mpnn_forward.6} parent=0 // pred_fallthru
    _
  // Predicated region
  $region14: #{mpnn_forward.6} parent=0 // pred_check
    _
  $region15: #{mpnn_forward.6} parent=0 // pred_check_branch
    %19 = sbr.rel (0) target = $region17
  $region16: #{mpnn_forward.6} parent=0 // pred_region
    _
  $region17: #{mpnn_forward.6} parent=0 // pred_fallthru
    _
  // Predicated region
  $region18: #{mpnn_forward.6} parent=0 // pred_check
    _
  $region19: #{mpnn_forward.6} parent=0 // pred_check_branch
    %21 = sbr.rel (0) target = $region21
  $region20: #{mpnn_forward.6} parent=0 // pred_region
    _
  $region21: #{mpnn_forward.6} parent=0 // pred_fallthru
    _
  // Predicated region
  $region22: #{mpnn_forward.6} parent=0 // pred_check
    _
  $region23: #{mpnn_forward.6} parent=0 // pred_check_branch
    %23 = sbr.rel (0) target = $region25
  $region24: #{mpnn_forward.6} parent=0 // pred_region
    _
  $region25: #{mpnn_forward.6} parent=0 // pred_fallthru
    _
  // Predicated region
  $region26: #{mpnn_forward.6} parent=0 // pred_check
    _
  $region27: #{mpnn_forward.6} parent=0 // pred_check_branch
    %25 = sbr.rel (0) target = $region29
  $region28: #{mpnn_forward.6} parent=0 // pred_region
    _
  $region29: #{mpnn_forward.6} parent=0 // pred_fallthru
    _
  %v27 = vld [vmem:[%s0] sm:$0xf]
  %v28 = vld [vmem:[%s0 + $0x4] sm:$0xf]
  %v29 = vld [vmem:[%s2] sm:$0xf]
  %v30 = vld [vmem:[%s2 + $0x4] sm:$0xf]
  %v31 = vld [vmem:[%s2 + $0x8] sm:$0xf]
  %v32 = vld [vmem:[%s2 + $0xc] sm:$0xf]
  %v33 = vld [vmem:[%s1] sm:$0xf]
  %v34 = vld [vmem:[%s1 + $0x4] sm:$0xf]
  %v35 = vld [vmem:[%s3] sm:$0xf]
  %v36 = vld [vmem:[%s3 + $0x4] sm:$0xf]
  %v37 = vld [vmem:[%s3 + $0x8] sm:$0xf]
  %v38 = vld [vmem:[%s3 + $0xc] sm:$0xf]
  %v41 = vunpack.c.l.b16 %v33
  %v42 = vunpack.c.l.b16 %v34
  %v43 = vpack.c.b16 %v42, %v41
  %v48 = vunpack.c.l.b16 %v35
  %v49 = vunpack.c.l.b16 %v36
  %v50 = vunpack.c.l.b16 %v37
  %v51 = vunpack.c.l.b16 %v38
  %v52 = vpack.c.b16 %v49, %v48
  %v53 = vpack.c.b16 %v51, %v50
  %vm56 = vcmask 261120
  %v58 = vsel %vm56, %v43, 0
  %60 = vmatprep.subr.bf16.mxu0 0
  %61 = vmatpush1.bf16.msra.mxu0 %v52
  %62 = vmatprep.subr.bf16.mxu0 0
  %63 = vmatpush1.bf16.msra.mxu0 %v53
  %64 = vmatprep.subr.bf16.mxu0 0
  %65 = vmatpush1.bf16.msra.mxu0 0
  %66 = vmatprep.subr.bf16.mxu0 0
  %67 = vmatpush1.bf16.msra.mxu0 0
  %68 = vmatprep.subr.bf16.mxu0 0
  %69 = vmatpush1.bf16.msra.mxu0 0
  %70 = vmatprep.subr.bf16.mxu0 0
  %71 = vmatpush1.bf16.msra.mxu0 0
  %72 = vmatprep.subr.bf16.mxu0 0
  %73 = vmatpush1.bf16.msra.mxu0 0
  %74 = vmatprep.subr.bf16.mxu0 0
  %75 = vmatpush1.bf16.msra.mxu0 0
  %76 = vmatprep.subr.bf16.mxu0 0
  %77 = vmatpush1.bf16.msra.mxu0 0
  %78 = vmatprep.subr.bf16.mxu0 0
  %79 = vmatpush1.bf16.msra.mxu0 0
  %80 = vmatprep.subr.bf16.mxu0 0
  %81 = vmatpush1.bf16.msra.mxu0 0
  %82 = vmatprep.subr.bf16.mxu0 0
  %83 = vmatpush1.bf16.msra.mxu0 0
  %84 = vmatprep.subr.bf16.mxu0 0
  %85 = vmatpush1.bf16.msra.mxu0 0
  %86 = vmatprep.subr.bf16.mxu0 0
  %87 = vmatpush1.bf16.msra.mxu0 0
  %88 = vmatprep.subr.bf16.mxu0 0
  %89 = vmatpush1.bf16.msra.mxu0 0
  %90 = vmatprep.subr.bf16.mxu0 0
  %91 = vmatpush1.bf16.msra.mxu0 0
  %92 = vmatprep.mubr.bf16.mxu0 0
  %93 = vmatmul.mubr.bf16.gmra.mrb[0].mxu0 %v58
  %v94 = vpop.f32.mrb[0].mxu0
  %v95 = vadd.f32 0.0, %v94
  %v96 = vpop.f32.mrb[0].mxu0
  %v97 = vpop.f32.mrb[0].mxu0
  %v98 = vadd.f32 0.0, %v97
  %v99 = vpop.f32.mrb[0].mxu0
  %100 = vdwg.mxu0
  %v103 = vunpack.c.l.b16 %v27
  %v104 = vunpack.c.l.b16 %v28
  %v105 = vpack.c.b16 %v104, %v103
  %v110 = vunpack.c.l.b16 %v29
  %v111 = vunpack.c.l.b16 %v30
  %v112 = vunpack.c.l.b16 %v31
  %v113 = vunpack.c.l.b16 %v32
  %v114 = vpack.c.b16 %v111, %v110
  %v115 = vpack.c.b16 %v113, %v112
  %v119 = vsel %vm56, %v105, 0
  %121 = vmatprep.subr.bf16.mxu0 0
  %122 = vmatpush1.bf16.msra.mxu0 %v114
  %123 = vmatprep.subr.bf16.mxu0 0
  %124 = vmatpush1.bf16.msra.mxu0 %v115
  %125 = vmatprep.subr.bf16.mxu0 0
  %126 = vmatpush1.bf16.msra.mxu0 0
  %127 = vmatprep.subr.bf16.mxu0 0
  %128 = vmatpush1.bf16.msra.mxu0 0
  %129 = vmatprep.subr.bf16.mxu0 0
  %130 = vmatpush1.bf16.msra.mxu0 0
  %131 = vmatprep.subr.bf16.mxu0 0
  %132 = vmatpush1.bf16.msra.mxu0 0
  %133 = vmatprep.subr.bf16.mxu0 0
  %134 = vmatpush1.bf16.msra.mxu0 0
  %135 = vmatprep.subr.bf16.mxu0 0
  %136 = vmatpush1.bf16.msra.mxu0 0
  %137 = vmatprep.subr.bf16.mxu0 0
  %138 = vmatpush1.bf16.msra.mxu0 0
  %139 = vmatprep.subr.bf16.mxu0 0
  %140 = vmatpush1.bf16.msra.mxu0 0
  %141 = vmatprep.subr.bf16.mxu0 0
  %142 = vmatpush1.bf16.msra.mxu0 0
  %143 = vmatprep.subr.bf16.mxu0 0
  %144 = vmatpush1.bf16.msra.mxu0 0
  %145 = vmatprep.subr.bf16.mxu0 0
  %146 = vmatpush1.bf16.msra.mxu0 0
  %147 = vmatprep.subr.bf16.mxu0 0
  %148 = vmatpush1.bf16.msra.mxu0 0
  %149 = vmatprep.subr.bf16.mxu0 0
  %150 = vmatpush1.bf16.msra.mxu0 0
  %151 = vmatprep.subr.bf16.mxu0 0
  %152 = vmatpush1.bf16.msra.mxu0 0
  %153 = vmatprep.mubr.bf16.mxu0 0
  %154 = vmatmul.mubr.bf16.gmra.mrb[0].mxu0 %v119
  %v155 = vpop.f32.mrb[0].mxu0
  %v156 = vadd.f32 %v95, %v155
  %v157 = vpop.f32.mrb[0].mxu0
  %v158 = vpop.f32.mrb[0].mxu0
  %v159 = vadd.f32 %v98, %v158
  %v160 = vpop.f32.mrb[0].mxu0
  %161 = vdwg.mxu0
  %v162 = vld [vmem:[%s4] sm:$0x1]
  %v164 = vlaneseq
  %v165 = vshrl.u32 %v164, 7
  %v166 = vsub.s32 0, %v165
  %v167 = vrot.slane %v162, %v166
  %v169 = vadd.f32 %v156, %v167
  %v170 = vadd.f32 %v159, %v167
  %v171 = vxor.u32 %v169, 2147483648
  %v172 = vxor.u32 %v170, 2147483648
  %v173 = vmul.f32 %v171, 1.442695
  %v174 = vpow.pop %v173
  %v175 = vmul.f32 %v172, 1.442695
  %v176 = vpow.pop %v175
  %v177 = vadd.f32 %v174, 1.0
  %v178 = vadd.f32 %v176, 1.0
  %v179 = vrcp.pop %v177
  %v180 = vmul.f32 1.0, %v179
  %v181 = vrcp.pop %v178
  %v182 = vmul.f32 1.0, %v181
  %v183 = vmul.f32 %v169, %v180
  %v184 = vmul.f32 %v170, %v182
  %v185 = vpack.c.bf16 %v184, %v183
  %v186 = vld [vmem:[%s5] sm:$0xf]
  %v187 = vld [vmem:[%s5 + $0x4] sm:$0xf]
  %v188 = vld [vmem:[%s5 + $0x8] sm:$0xf]
  %v189 = vld [vmem:[%s5 + $0xc] sm:$0xf]
  %v190 = vld [vmem:[%s5 + $0x10] sm:$0xf]
  %v191 = vld [vmem:[%s5 + $0x14] sm:$0xf]
  %v192 = vld [vmem:[%s5 + $0x18] sm:$0xf]
  %v193 = vld [vmem:[%s5 + $0x1c] sm:$0xf]
  %v194 = vld [vmem:[%s5 + $0x20] sm:$0xf]
  %v195 = vld [vmem:[%s5 + $0x24] sm:$0xf]
  %v196 = vld [vmem:[%s5 + $0x28] sm:$0xf]
  %v197 = vld [vmem:[%s5 + $0x2c] sm:$0xf]
  %v198 = vld [vmem:[%s5 + $0x30] sm:$0xf]
  %v199 = vld [vmem:[%s5 + $0x34] sm:$0xf]
  %v200 = vld [vmem:[%s5 + $0x38] sm:$0xf]
  %v201 = vld [vmem:[%s5 + $0x3c] sm:$0xf]
  %v202 = vld [vmem:[%s6] sm:$0x1]
  %v204 = vlaneseq
  %v205 = vshrl.u32 %v204, 7
  %v206 = vsub.s32 0, %v205
  %v207 = vrot.slane %v202, %v206
  %v225 = vunpack.c.l.b16 %v186
  %v226 = vunpack.c.l.b16 %v187
  %v227 = vunpack.c.l.b16 %v188
  %v228 = vunpack.c.l.b16 %v189
  %v229 = vunpack.c.l.b16 %v190
  %v230 = vunpack.c.l.b16 %v191
  %v231 = vunpack.c.l.b16 %v192
  %v232 = vunpack.c.l.b16 %v193
  %v233 = vunpack.c.l.b16 %v194
  %v234 = vunpack.c.l.b16 %v195
  %v235 = vunpack.c.l.b16 %v196
  %v236 = vunpack.c.l.b16 %v197
  %v237 = vunpack.c.l.b16 %v198
  %v238 = vunpack.c.l.b16 %v199
  %v239 = vunpack.c.l.b16 %v200
  %v240 = vunpack.c.l.b16 %v201
  %v241 = vpack.c.b16 %v226, %v225
  %v242 = vpack.c.b16 %v228, %v227
  %v243 = vpack.c.b16 %v230, %v229
  %v244 = vpack.c.b16 %v232, %v231
  %v245 = vpack.c.b16 %v234, %v233
  %v246 = vpack.c.b16 %v236, %v235
  %v247 = vpack.c.b16 %v238, %v237
  %v248 = vpack.c.b16 %v240, %v239
  %257 = vmatprep.subr.bf16.mxu0 0
  %258 = vmatpush1.bf16.msra.mxu0 %v241
  %259 = vmatprep.subr.bf16.mxu0 0
  %260 = vmatpush1.bf16.msra.mxu0 %v242
  %261 = vmatprep.subr.bf16.mxu0 0
  %262 = vmatpush1.bf16.msra.mxu0 %v243
  %263 = vmatprep.subr.bf16.mxu0 0
  %264 = vmatpush1.bf16.msra.mxu0 %v244
  %265 = vmatprep.subr.bf16.mxu0 0
  %266 = vmatpush1.bf16.msra.mxu0 %v245
  %267 = vmatprep.subr.bf16.mxu0 0
  %268 = vmatpush1.bf16.msra.mxu0 %v246
  %269 = vmatprep.subr.bf16.mxu0 0
  %270 = vmatpush1.bf16.msra.mxu0 %v247
  %271 = vmatprep.subr.bf16.mxu0 0
  %272 = vmatpush1.bf16.msra.mxu0 %v248
  %273 = vmatprep.subr.bf16.mxu0 0
  %274 = vmatpush1.bf16.msra.mxu0 0
  %275 = vmatprep.subr.bf16.mxu0 0
  %276 = vmatpush1.bf16.msra.mxu0 0
  %277 = vmatprep.subr.bf16.mxu0 0
  %278 = vmatpush1.bf16.msra.mxu0 0
  %279 = vmatprep.subr.bf16.mxu0 0
  %280 = vmatpush1.bf16.msra.mxu0 0
  %281 = vmatprep.subr.bf16.mxu0 0
  %282 = vmatpush1.bf16.msra.mxu0 0
  %283 = vmatprep.subr.bf16.mxu0 0
  %284 = vmatpush1.bf16.msra.mxu0 0
  %285 = vmatprep.subr.bf16.mxu0 0
  %286 = vmatpush1.bf16.msra.mxu0 0
  %287 = vmatprep.subr.bf16.mxu0 0
  %288 = vmatpush1.bf16.msra.mxu0 0
  %289 = vmatprep.mubr.bf16.mxu0 0
  %290 = vmatmul.mubr.bf16.gmra.mrb[0].mxu0 %v185
  %v291 = vpop.f32.mrb[0].mxu0
  %v292 = vadd.f32 %v207, %v291
  %v293 = vpop.f32.mrb[0].mxu0
  %v294 = vpop.f32.mrb[0].mxu0
  %v295 = vadd.f32 %v207, %v294
  %v296 = vpop.f32.mrb[0].mxu0
  %297 = vdwg.mxu0
  %298 = vst.msk [vmem:[%s7] sm:$0xff] %vm56, %v292
  %299 = vst.msk [vmem:[%s7 + $0x8] sm:$0xff] %vm56, %v295
  // Predicated region
  $region30: #{mpnn_forward.6} parent=0 // pred_check
    _
  $region31: #{mpnn_forward.6} parent=0 // pred_check_branch
    %301 = sbr.rel (0) target = $region33
  $region32: #{mpnn_forward.6} parent=0 // pred_region
    _
  $region33: #{mpnn_forward.6} parent=0 // pred_fallthru
    _
  // Predicated region
  $region34: #{mpnn_forward.6} parent=0 // pred_check
    _
  $region35: #{mpnn_forward.6} parent=0 // pred_check_branch
    %303 = sbr.rel (0) target = $region37
  $region36: #{mpnn_forward.6} parent=0 // pred_region
    _
  $region37: #{mpnn_forward.6} parent=0 // pred_fallthru
    _

// kernel: mpnn_forward.9
$region0: #{mpnn_forward.9}
  #allocation0 [shape = 'u32[]', space=smem, size = 0x4, offset = 0x4, fixed_abs, tag = 'smem constant byte address 0x4 - core index']
  #allocation1 [shape = 'u32[144,128]{1,0:T(1,128)}', space=vmem, size = 0x12000, scoped, tag = 'internal scratch']
  %s0 = inlined_call_operand.vmem [shape: bf16[8,32], index: 0, kind: input, shape index: {}]
  %s1 = inlined_call_operand.vmem [shape: bf16[32,128], index: 1, kind: input, shape index: {}]
  %s2 = inlined_call_operand.vmem [shape: f32[1,128], index: 2, kind: input, shape index: {}]
  %s3 = inlined_call_operand.vmem [shape: bf16[128,4], index: 3, kind: input, shape index: {}]
  %s4 = inlined_call_operand.vmem [shape: f32[1,4], index: 4, kind: input, shape index: {}]
  %s5 = inlined_call_operand.vmem [shape: f32[8,4], index: 5, kind: output, shape index: {}]
  %s6 = sld [smem:[#allocation0]]
  $region30: #{mpnn_forward.9} parent=0
    _
  %s8 = ssub.s32 1, %s6
  %s9 = scalar_select 0, %s8, %s6
  // Predicated region
  $region2: #{mpnn_forward.9} parent=0 // pred_check
    _
  $region3: #{mpnn_forward.9} parent=0 // pred_check_branch
    %11 = sbr.rel (0) target = $region5
  $region4: #{mpnn_forward.9} parent=0 // pred_region
    _
  $region5: #{mpnn_forward.9} parent=0 // pred_fallthru
    _
  // Predicated region
  $region6: #{mpnn_forward.9} parent=0 // pred_check
    _
  $region7: #{mpnn_forward.9} parent=0 // pred_check_branch
    %13 = sbr.rel (0) target = $region9
  $region8: #{mpnn_forward.9} parent=0 // pred_region
    _
  $region9: #{mpnn_forward.9} parent=0 // pred_fallthru
    _
  // Predicated region
  $region10: #{mpnn_forward.9} parent=0 // pred_check
    _
  $region11: #{mpnn_forward.9} parent=0 // pred_check_branch
    %15 = sbr.rel (0) target = $region13
  $region12: #{mpnn_forward.9} parent=0 // pred_region
    _
  $region13: #{mpnn_forward.9} parent=0 // pred_fallthru
    _
  // Predicated region
  $region14: #{mpnn_forward.9} parent=0 // pred_check
    _
  $region15: #{mpnn_forward.9} parent=0 // pred_check_branch
    %17 = sbr.rel (0) target = $region17
  $region16: #{mpnn_forward.9} parent=0 // pred_region
    _
  $region17: #{mpnn_forward.9} parent=0 // pred_fallthru
    _
  // Predicated region
  $region18: #{mpnn_forward.9} parent=0 // pred_check
    _
  $region19: #{mpnn_forward.9} parent=0 // pred_check_branch
    %19 = sbr.rel (0) target = $region21
  $region20: #{mpnn_forward.9} parent=0 // pred_region
    _
  $region21: #{mpnn_forward.9} parent=0 // pred_fallthru
    _
  %v21 = vld [vmem:[%s0] sm:$0xf]
  %v22 = vld [vmem:[%s1] sm:$0xf]
  %v23 = vld [vmem:[%s1 + $0x4] sm:$0xf]
  %v24 = vld [vmem:[%s1 + $0x8] sm:$0xf]
  %v25 = vld [vmem:[%s1 + $0xc] sm:$0xf]
  %v26 = vld [vmem:[%s2] sm:$0x1]
  %v28 = vlaneseq
  %v29 = vshrl.u32 %v28, 7
  %v30 = vsub.s32 0, %v29
  %v31 = vrot.slane %v26, %v30
  %v37 = vunpack.c.l.b16 %v22
  %v38 = vunpack.c.l.b16 %v23
  %v39 = vunpack.c.l.b16 %v24
  %v40 = vunpack.c.l.b16 %v25
  %v41 = vpack.c.b16 %v38, %v37
  %v42 = vpack.c.b16 %v40, %v39
  %vm45 = vcmask 261120
  %v47 = vsel %vm45, %v21, 0
  %49 = vmatprep.subr.bf16.mxu0 0
  %50 = vmatpush1.bf16.msra.mxu0 %v41
  %51 = vmatprep.subr.bf16.mxu0 0
  %52 = vmatpush1.bf16.msra.mxu0 %v42
  %53 = vmatprep.subr.bf16.mxu0 0
  %54 = vmatpush1.bf16.msra.mxu0 0
  %55 = vmatprep.subr.bf16.mxu0 0
  %56 = vmatpush1.bf16.msra.mxu0 0
  %57 = vmatprep.subr.bf16.mxu0 0
  %58 = vmatpush1.bf16.msra.mxu0 0
  %59 = vmatprep.subr.bf16.mxu0 0
  %60 = vmatpush1.bf16.msra.mxu0 0
  %61 = vmatprep.subr.bf16.mxu0 0
  %62 = vmatpush1.bf16.msra.mxu0 0
  %63 = vmatprep.subr.bf16.mxu0 0
  %64 = vmatpush1.bf16.msra.mxu0 0
  %65 = vmatprep.subr.bf16.mxu0 0
  %66 = vmatpush1.bf16.msra.mxu0 0
  %67 = vmatprep.subr.bf16.mxu0 0
  %68 = vmatpush1.bf16.msra.mxu0 0
  %69 = vmatprep.subr.bf16.mxu0 0
  %70 = vmatpush1.bf16.msra.mxu0 0
  %71 = vmatprep.subr.bf16.mxu0 0
  %72 = vmatpush1.bf16.msra.mxu0 0
  %73 = vmatprep.subr.bf16.mxu0 0
  %74 = vmatpush1.bf16.msra.mxu0 0
  %75 = vmatprep.subr.bf16.mxu0 0
  %76 = vmatpush1.bf16.msra.mxu0 0
  %77 = vmatprep.subr.bf16.mxu0 0
  %78 = vmatpush1.bf16.msra.mxu0 0
  %79 = vmatprep.subr.bf16.mxu0 0
  %80 = vmatpush1.bf16.msra.mxu0 0
  %81 = vmatprep.mubr.bf16.mxu0 0
  %82 = vmatmul.mubr.bf16.gmra.mrb[0].mxu0 %v47
  %v83 = vpop.f32.mrb[0].mxu0
  %v84 = vadd.f32 %v31, %v83
  %v85 = vpop.f32.mrb[0].mxu0
  %v86 = vpop.f32.mrb[0].mxu0
  %v87 = vpop.f32.mrb[0].mxu0
  %88 = vdwg.mxu0
  %v89 = vxor.u32 %v84, 2147483648
  %v90 = vmul.f32 %v89, 1.442695
  %v91 = vpow.pop %v90
  %v92 = vadd.f32 %v91, 1.0
  %v93 = vrcp.pop %v92
  %v94 = vmul.f32 1.0, %v93
  %v95 = vmul.f32 %v84, %v94
  %v96 = vpack.c.bf16 %v95, %v95
  %v97 = vld [vmem:[%s3] sm:$0xf]
  %v98 = vld [vmem:[%s3 + $0x4] sm:$0xf]
  %v99 = vld [vmem:[%s3 + $0x8] sm:$0xf]
  %v100 = vld [vmem:[%s3 + $0xc] sm:$0xf]
  %v101 = vld [vmem:[%s3 + $0x10] sm:$0xf]
  %v102 = vld [vmem:[%s3 + $0x14] sm:$0xf]
  %v103 = vld [vmem:[%s3 + $0x18] sm:$0xf]
  %v104 = vld [vmem:[%s3 + $0x1c] sm:$0xf]
  %v105 = vld [vmem:[%s3 + $0x20] sm:$0xf]
  %v106 = vld [vmem:[%s3 + $0x24] sm:$0xf]
  %v107 = vld [vmem:[%s3 + $0x28] sm:$0xf]
  %v108 = vld [vmem:[%s3 + $0x2c] sm:$0xf]
  %v109 = vld [vmem:[%s3 + $0x30] sm:$0xf]
  %v110 = vld [vmem:[%s3 + $0x34] sm:$0xf]
  %v111 = vld [vmem:[%s3 + $0x38] sm:$0xf]
  %v112 = vld [vmem:[%s3 + $0x3c] sm:$0xf]
  %v113 = vld [vmem:[%s4] sm:$0x1]
  %v115 = vlaneseq
  %v116 = vshrl.u32 %v115, 7
  %v117 = vsub.s32 0, %v116
  %v118 = vrot.slane %v113, %v117
  %v136 = vunpack.c.l.b16 %v97
  %v137 = vunpack.c.l.b16 %v98
  %v138 = vunpack.c.l.b16 %v99
  %v139 = vunpack.c.l.b16 %v100
  %v140 = vunpack.c.l.b16 %v101
  %v141 = vunpack.c.l.b16 %v102
  %v142 = vunpack.c.l.b16 %v103
  %v143 = vunpack.c.l.b16 %v104
  %v144 = vunpack.c.l.b16 %v105
  %v145 = vunpack.c.l.b16 %v106
  %v146 = vunpack.c.l.b16 %v107
  %v147 = vunpack.c.l.b16 %v108
  %v148 = vunpack.c.l.b16 %v109
  %v149 = vunpack.c.l.b16 %v110
  %v150 = vunpack.c.l.b16 %v111
  %v151 = vunpack.c.l.b16 %v112
  %v152 = vpack.c.b16 %v137, %v136
  %v153 = vpack.c.b16 %v139, %v138
  %v154 = vpack.c.b16 %v141, %v140
  %v155 = vpack.c.b16 %v143, %v142
  %v156 = vpack.c.b16 %v145, %v144
  %v157 = vpack.c.b16 %v147, %v146
  %v158 = vpack.c.b16 %v149, %v148
  %v159 = vpack.c.b16 %v151, %v150
  %168 = vmatprep.subr.bf16.mxu0 0
  %169 = vmatpush1.bf16.msra.mxu0 %v152
  %170 = vmatprep.subr.bf16.mxu0 0
  %171 = vmatpush1.bf16.msra.mxu0 %v153
  %172 = vmatprep.subr.bf16.mxu0 0
  %173 = vmatpush1.bf16.msra.mxu0 %v154
  %174 = vmatprep.subr.bf16.mxu0 0
  %175 = vmatpush1.bf16.msra.mxu0 %v155
  %176 = vmatprep.subr.bf16.mxu0 0
  %177 = vmatpush1.bf16.msra.mxu0 %v156
  %178 = vmatprep.subr.bf16.mxu0 0
  %179 = vmatpush1.bf16.msra.mxu0 %v157
  %180 = vmatprep.subr.bf16.mxu0 0
  %181 = vmatpush1.bf16.msra.mxu0 %v158
  %182 = vmatprep.subr.bf16.mxu0 0
  %183 = vmatpush1.bf16.msra.mxu0 %v159
  %184 = vmatprep.subr.bf16.mxu0 0
  %185 = vmatpush1.bf16.msra.mxu0 0
  %186 = vmatprep.subr.bf16.mxu0 0
  %187 = vmatpush1.bf16.msra.mxu0 0
  %188 = vmatprep.subr.bf16.mxu0 0
  %189 = vmatpush1.bf16.msra.mxu0 0
  %190 = vmatprep.subr.bf16.mxu0 0
  %191 = vmatpush1.bf16.msra.mxu0 0
  %192 = vmatprep.subr.bf16.mxu0 0
  %193 = vmatpush1.bf16.msra.mxu0 0
  %194 = vmatprep.subr.bf16.mxu0 0
  %195 = vmatpush1.bf16.msra.mxu0 0
  %196 = vmatprep.subr.bf16.mxu0 0
  %197 = vmatpush1.bf16.msra.mxu0 0
  %198 = vmatprep.subr.bf16.mxu0 0
  %199 = vmatpush1.bf16.msra.mxu0 0
  %200 = vmatprep.mubr.bf16.mxu0 0
  %201 = vmatmul.mubr.bf16.gmra.mrb[0].mxu0 %v96
  %v202 = vpop.f32.mrb[0].mxu0
  %v203 = vadd.f32 %v118, %v202
  %v204 = vpop.f32.mrb[0].mxu0
  %v205 = vpop.f32.mrb[0].mxu0
  %v206 = vpop.f32.mrb[0].mxu0
  %207 = vdwg.mxu0
  %vm208 = vcmask 31744
  %209 = vst.msk [vmem:[%s5] sm:$0xff] %vm208, %v203
  // Predicated region
  $region22: #{mpnn_forward.9} parent=0 // pred_check
    _
  $region23: #{mpnn_forward.9} parent=0 // pred_check_branch
    %211 = sbr.rel (0) target = $region25
  $region24: #{mpnn_forward.9} parent=0 // pred_region
    _
  $region25: #{mpnn_forward.9} parent=0 // pred_fallthru
    _
  // Predicated region
  $region26: #{mpnn_forward.9} parent=0 // pred_check
    _
  $region27: #{mpnn_forward.9} parent=0 // pred_check_branch
    %213 = sbr.rel (0) target = $region29
  $region28: #{mpnn_forward.9} parent=0 // pred_region
    _
  $region29: #{mpnn_forward.9} parent=0 // pred_fallthru
    _

// kernel: mpnn_forward.5
$region0: #{mpnn_forward.5}
  #allocation0 [shape = 'u32[]', space=smem, size = 0x4, offset = 0x4, fixed_abs, tag = 'smem constant byte address 0x4 - core index']
  #allocation1 [shape = 'u32[144,128]{1,0:T(1,128)}', space=vmem, size = 0x12000, scoped, tag = 'internal scratch']
  %s0 = inlined_call_operand.vmem [shape: s32[32,1], index: 0, kind: input, shape index: {}]
  %s1 = inlined_call_operand.vmem [shape: s32[1,32], index: 1, kind: input, shape index: {}]
  %s2 = inlined_call_operand.vmem [shape: s32[32,1], index: 2, kind: input, shape index: {}]
  %s3 = inlined_call_operand.vmem [shape: f32[32,1], index: 3, kind: input, shape index: {}]
  %s4 = inlined_call_operand.vmem [shape: f32[1,8], index: 4, kind: input, shape index: {}]
  %s5 = inlined_call_operand.vmem [shape: bf16[16,32], index: 5, kind: input, shape index: {}]
  %s6 = inlined_call_operand.vmem [shape: bf16[32,128], index: 6, kind: input, shape index: {}]
  %s7 = inlined_call_operand.vmem [shape: bf16[32,128], index: 7, kind: input, shape index: {}]
  %s8 = inlined_call_operand.vmem [shape: bf16[8,128], index: 8, kind: input, shape index: {}]
  %s9 = inlined_call_operand.vmem [shape: f32[1,128], index: 9, kind: input, shape index: {}]
  %s10 = inlined_call_operand.vmem [shape: bf16[128,32], index: 10, kind: input, shape index: {}]
  %s11 = inlined_call_operand.vmem [shape: f32[1,32], index: 11, kind: input, shape index: {}]
  %s12 = inlined_call_operand.vmem [shape: f32[16,32], index: 12, kind: output, shape index: {}]
  %s13 = sld [smem:[#allocation0]]
  $region62: #{mpnn_forward.5} parent=0
    _
  %s15 = ssub.s32 1, %s13
  %s16 = scalar_select 0, %s15, %s13
  // Predicated region
  $region2: #{mpnn_forward.5} parent=0 // pred_check
    _
  $region3: #{mpnn_forward.5} parent=0 // pred_check_branch
    %18 = sbr.rel (0) target = $region5
  $region4: #{mpnn_forward.5} parent=0 // pred_region
    _
  $region5: #{mpnn_forward.5} parent=0 // pred_fallthru
    _
  // Predicated region
  $region6: #{mpnn_forward.5} parent=0 // pred_check
    _
  $region7: #{mpnn_forward.5} parent=0 // pred_check_branch
    %20 = sbr.rel (0) target = $region9
  $region8: #{mpnn_forward.5} parent=0 // pred_region
    _
  $region9: #{mpnn_forward.5} parent=0 // pred_fallthru
    _
  // Predicated region
  $region10: #{mpnn_forward.5} parent=0 // pred_check
    _
  $region11: #{mpnn_forward.5} parent=0 // pred_check_branch
    %22 = sbr.rel (0) target = $region13
  $region12: #{mpnn_forward.5} parent=0 // pred_region
    _
  $region13: #{mpnn_forward.5} parent=0 // pred_fallthru
    _
  // Predicated region
  $region14: #{mpnn_forward.5} parent=0 // pred_check
    _
  $region15: #{mpnn_forward.5} parent=0 // pred_check_branch
    %24 = sbr.rel (0) target = $region17
  $region16: #{mpnn_forward.5} parent=0 // pred_region
    _
  $region17: #{mpnn_forward.5} parent=0 // pred_fallthru
    _
  // Predicated region
  $region18: #{mpnn_forward.5} parent=0 // pred_check
    _
  $region19: #{mpnn_forward.5} parent=0 // pred_check_branch
    %26 = sbr.rel (0) target = $region21
  $region20: #{mpnn_forward.5} parent=0 // pred_region
    _
  $region21: #{mpnn_forward.5} parent=0 // pred_fallthru
    _
  // Predicated region
  $region22: #{mpnn_forward.5} parent=0 // pred_check
    _
  $region23: #{mpnn_forward.5} parent=0 // pred_check_branch
    %28 = sbr.rel (0) target = $region25
  $region24: #{mpnn_forward.5} parent=0 // pred_region
    _
  $region25: #{mpnn_forward.5} parent=0 // pred_fallthru
    _
  // Predicated region
  $region26: #{mpnn_forward.5} parent=0 // pred_check
    _
  $region27: #{mpnn_forward.5} parent=0 // pred_check_branch
    %30 = sbr.rel (0) target = $region29
  $region28: #{mpnn_forward.5} parent=0 // pred_region
    _
  $region29: #{mpnn_forward.5} parent=0 // pred_fallthru
    _
  // Predicated region
  $region30: #{mpnn_forward.5} parent=0 // pred_check
    _
  $region31: #{mpnn_forward.5} parent=0 // pred_check_branch
    %32 = sbr.rel (0) target = $region33
  $region32: #{mpnn_forward.5} parent=0 // pred_region
    _
  $region33: #{mpnn_forward.5} parent=0 // pred_fallthru
    _
  // Predicated region
  $region34: #{mpnn_forward.5} parent=0 // pred_check
    _
  $region35: #{mpnn_forward.5} parent=0 // pred_check_branch
    %34 = sbr.rel (0) target = $region37
  $region36: #{mpnn_forward.5} parent=0 // pred_region
    _
  $region37: #{mpnn_forward.5} parent=0 // pred_fallthru
    _
  // Predicated region
  $region38: #{mpnn_forward.5} parent=0 // pred_check
    _
  $region39: #{mpnn_forward.5} parent=0 // pred_check_branch
    %36 = sbr.rel (0) target = $region41
  $region40: #{mpnn_forward.5} parent=0 // pred_region
    _
  $region41: #{mpnn_forward.5} parent=0 // pred_fallthru
    _
  // Predicated region
  $region42: #{mpnn_forward.5} parent=0 // pred_check
    _
  $region43: #{mpnn_forward.5} parent=0 // pred_check_branch
    %38 = sbr.rel (0) target = $region45
  $region44: #{mpnn_forward.5} parent=0 // pred_region
    _
  $region45: #{mpnn_forward.5} parent=0 // pred_fallthru
    _
  // Predicated region
  $region46: #{mpnn_forward.5} parent=0 // pred_check
    _
  $region47: #{mpnn_forward.5} parent=0 // pred_check_branch
    %40 = sbr.rel (0) target = $region49
  $region48: #{mpnn_forward.5} parent=0 // pred_region
    _
  $region49: #{mpnn_forward.5} parent=0 // pred_fallthru
    _
  %v42 = vld [vmem:[%s0] sm:$0xff]
  %v43 = vld [vmem:[%s0 + $0x8] sm:$0xff]
  %v44 = vld [vmem:[%s0 + $0x10] sm:$0xff]
  %v45 = vld [vmem:[%s0 + $0x18] sm:$0xff]
  %v46 = vlaneseq
  %v47 = vand.u32 %v46, 127
  %48 = vset.pattern.permute.xlu0 0
  %49 = vperm.xlu0 %48, %v42
  %v50 = vpop.permute.xlu0 %49
  %51 = vset.pattern.permute.xlu0 0
  %52 = vperm.xlu0 %51, %v43
  %v53 = vpop.permute.xlu0 %52
  %54 = vset.pattern.permute.xlu0 0
  %55 = vperm.xlu0 %54, %v44
  %v56 = vpop.permute.xlu0 %55
  %57 = vset.pattern.permute.xlu0 0
  %58 = vperm.xlu0 %57, %v45
  %v59 = vpop.permute.xlu0 %58
  %vm60 = vcmp.eq.s32.totalorder %v50, %v47
  %vm61 = vcmp.eq.s32.totalorder %v53, %v47
  %vm62 = vcmp.eq.s32.totalorder %v56, %v47
  %vm63 = vcmp.eq.s32.totalorder %v59, %v47
  %v64 = vld [vmem:[%s2] sm:$0xff]
  %v65 = vld [vmem:[%s2 + $0x8] sm:$0xff]
  %v66 = vld [vmem:[%s2 + $0x10] sm:$0xff]
  %v67 = vld [vmem:[%s2 + $0x18] sm:$0xff]
  %68 = vset.pattern.permute.xlu0 0
  %69 = vperm.xlu0 %68, %v64
  %v70 = vpop.permute.xlu0 %69
  %71 = vset.pattern.permute.xlu0 0
  %72 = vperm.xlu0 %71, %v65
  %v73 = vpop.permute.xlu0 %72
  %74 = vset.pattern.permute.xlu0 0
  %75 = vperm.xlu0 %74, %v66
  %v76 = vpop.permute.xlu0 %75
  %77 = vset.pattern.permute.xlu0 0
  %78 = vperm.xlu0 %77, %v67
  %v79 = vpop.permute.xlu0 %78
  %vm80 = vcmp.eq.s32.totalorder %v70, %v47
  %vm81 = vcmp.eq.s32.totalorder %v73, %v47
  %vm82 = vcmp.eq.s32.totalorder %v76, %v47
  %vm83 = vcmp.eq.s32.totalorder %v79, %v47
  %v84 = vld [vmem:[%s5] sm:$0xf]
  %v85 = vld [vmem:[%s5 + $0x4] sm:$0xf]
  %v86 = vsel %vm60, 1, 0
  %v87 = vsel %vm61, 1, 0
  %v88 = vsel %vm62, 1, 0
  %v89 = vsel %vm63, 1, 0
  %v90 = vcvt.s32.f32 %v86
  %v91 = vcvt.s32.f32 %v87
  %v92 = vcvt.s32.f32 %v88
  %v93 = vcvt.s32.f32 %v89
  %v94 = vpack.c.bf16 %v91, %v90
  %v95 = vpack.c.bf16 %v93, %v92
  %v98 = vunpack.c.l.b16 %v84
  %v99 = vunpack.c.l.b16 %v85
  %v100 = vpack.c.b16 %v99, %v98
  %vm102 = vcmask 130048
  %v104 = vsel %vm102, %v94, 0
  %v107 = vsel %vm102, %v95, 0
  %109 = vmatprep.subr.bf16.mxu0 0
  %110 = vmatpush1.bf16.msra.mxu0 %v100
  %111 = vmatprep.subr.bf16.mxu0 0
  %112 = vmatpush1.bf16.msra.mxu0 0
  %113 = vmatprep.subr.bf16.mxu0 0
  %114 = vmatpush1.bf16.msra.mxu0 0
  %115 = vmatprep.subr.bf16.mxu0 0
  %116 = vmatpush1.bf16.msra.mxu0 0
  %117 = vmatprep.subr.bf16.mxu0 0
  %118 = vmatpush1.bf16.msra.mxu0 0
  %119 = vmatprep.subr.bf16.mxu0 0
  %120 = vmatpush1.bf16.msra.mxu0 0
  %121 = vmatprep.subr.bf16.mxu0 0
  %122 = vmatpush1.bf16.msra.mxu0 0
  %123 = vmatprep.subr.bf16.mxu0 0
  %124 = vmatpush1.bf16.msra.mxu0 0
  %125 = vmatprep.subr.bf16.mxu0 0
  %126 = vmatpush1.bf16.msra.mxu0 0
  %127 = vmatprep.subr.bf16.mxu0 0
  %128 = vmatpush1.bf16.msra.mxu0 0
  %129 = vmatprep.subr.bf16.mxu0 0
  %130 = vmatpush1.bf16.msra.mxu0 0
  %131 = vmatprep.subr.bf16.mxu0 0
  %132 = vmatpush1.bf16.msra.mxu0 0
  %133 = vmatprep.subr.bf16.mxu0 0
  %134 = vmatpush1.bf16.msra.mxu0 0
  %135 = vmatprep.subr.bf16.mxu0 0
  %136 = vmatpush1.bf16.msra.mxu0 0
  %137 = vmatprep.subr.bf16.mxu0 0
  %138 = vmatpush1.bf16.msra.mxu0 0
  %139 = vmatprep.subr.bf16.mxu0 0
  %140 = vmatpush1.bf16.msra.mxu0 0
  %141 = vmatprep.mubr.bf16.mxu0 0
  %142 = vmatmul.mubr.bf16.gmra.mrb[0].mxu0 %v104
  %v143 = vpop.f32.mrb[0].mxu0
  %v144 = vadd.f32 0.0, %v143
  %v145 = vpop.f32.mrb[0].mxu0
  %v146 = vpop.f32.mrb[0].mxu0
  %v147 = vadd.f32 0.0, %v146
  %v148 = vpop.f32.mrb[0].mxu0
  %149 = vmatprep.mubr.bf16.mxu0 0
  %150 = vmatmul.mubr.bf16.gmra.mrb[0].mxu0 %v107
  %v151 = vpop.f32.mrb[0].mxu0
  %v152 = vadd.f32 0.0, %v151
  %v153 = vpop.f32.mrb[0].mxu0
  %v154 = vpop.f32.mrb[0].mxu0
  %v155 = vadd.f32 0.0, %v154
  %v156 = vpop.f32.mrb[0].mxu0
  %157 = vdwg.mxu0
  %v158 = vpack.c.bf16 %v147, %v144
  %v159 = vpack.c.bf16 %v155, %v152
  %v160 = vsel %vm80, 1, 0
  %v161 = vsel %vm81, 1, 0
  %v162 = vsel %vm82, 1, 0
  %v163 = vsel %vm83, 1, 0
  %v164 = vcvt.s32.f32 %v160
  %v165 = vcvt.s32.f32 %v161
  %v166 = vcvt.s32.f32 %v162
  %v167 = vcvt.s32.f32 %v163
  %v168 = vpack.c.bf16 %v165, %v164
  %v169 = vpack.c.bf16 %v167, %v166
  %v171 = vsel %vm102, %v168, 0
  %v174 = vsel %vm102, %v169, 0
  %176 = vmatprep.subr.bf16.mxu0 0
  %177 = vmatpush1.bf16.msra.mxu0 %v100
  %178 = vmatprep.subr.bf16.mxu0 0
  %179 = vmatpush1.bf16.msra.mxu0 0
  %180 = vmatprep.subr.bf16.mxu0 0
  %181 = vmatpush1.bf16.msra.mxu0 0
  %182 = vmatprep.subr.bf16.mxu0 0
  %183 = vmatpush1.bf16.msra.mxu0 0
  %184 = vmatprep.subr.bf16.mxu0 0
  %185 = vmatpush1.bf16.msra.mxu0 0
  %186 = vmatprep.subr.bf16.mxu0 0
  %187 = vmatpush1.bf16.msra.mxu0 0
  %188 = vmatprep.subr.bf16.mxu0 0
  %189 = vmatpush1.bf16.msra.mxu0 0
  %190 = vmatprep.subr.bf16.mxu0 0
  %191 = vmatpush1.bf16.msra.mxu0 0
  %192 = vmatprep.subr.bf16.mxu0 0
  %193 = vmatpush1.bf16.msra.mxu0 0
  %194 = vmatprep.subr.bf16.mxu0 0
  %195 = vmatpush1.bf16.msra.mxu0 0
  %196 = vmatprep.subr.bf16.mxu0 0
  %197 = vmatpush1.bf16.msra.mxu0 0
  %198 = vmatprep.subr.bf16.mxu0 0
  %199 = vmatpush1.bf16.msra.mxu0 0
  %200 = vmatprep.subr.bf16.mxu0 0
  %201 = vmatpush1.bf16.msra.mxu0 0
  %202 = vmatprep.subr.bf16.mxu0 0
  %203 = vmatpush1.bf16.msra.mxu0 0
  %204 = vmatprep.subr.bf16.mxu0 0
  %205 = vmatpush1.bf16.msra.mxu0 0
  %206 = vmatprep.subr.bf16.mxu0 0
  %207 = vmatpush1.bf16.msra.mxu0 0
  %208 = vmatprep.mubr.bf16.mxu0 0
  %209 = vmatmul.mubr.bf16.gmra.mrb[0].mxu0 %v171
  %v210 = vpop.f32.mrb[0].mxu0
  %v211 = vadd.f32 0.0, %v210
  %v212 = vpop.f32.mrb[0].mxu0
  %v213 = vpop.f32.mrb[0].mxu0
  %v214 = vadd.f32 0.0, %v213
  %v215 = vpop.f32.mrb[0].mxu0
  %216 = vmatprep.mubr.bf16.mxu0 0
  %217 = vmatmul.mubr.bf16.gmra.mrb[0].mxu0 %v174
  %v218 = vpop.f32.mrb[0].mxu0
  %v219 = vadd.f32 0.0, %v218
  %v220 = vpop.f32.mrb[0].mxu0
  %v221 = vpop.f32.mrb[0].mxu0
  %v222 = vadd.f32 0.0, %v221
  %v223 = vpop.f32.mrb[0].mxu0
  %224 = vdwg.mxu0
  %v225 = vpack.c.bf16 %v214, %v211
  %v226 = vpack.c.bf16 %v222, %v219
  %v227 = vld [vmem:[%s6] sm:$0xf]
  %v228 = vld [vmem:[%s6 + $0x4] sm:$0xf]
  %v229 = vld [vmem:[%s6 + $0x8] sm:$0xf]
  %v230 = vld [vmem:[%s6 + $0xc] sm:$0xf]
  %v231 = vld [vmem:[%s7] sm:$0xf]
  %v232 = vld [vmem:[%s7 + $0x4] sm:$0xf]
  %v233 = vld [vmem:[%s7 + $0x8] sm:$0xf]
  %v234 = vld [vmem:[%s7 + $0xc] sm:$0xf]
  %v239 = vunpack.c.l.b16 %v231
  %v240 = vunpack.c.l.b16 %v232
  %v241 = vunpack.c.l.b16 %v233
  %v242 = vunpack.c.l.b16 %v234
  %v243 = vpack.c.b16 %v240, %v239
  %v244 = vpack.c.b16 %v242, %v241
  %vm247 = vcmask 261120
  %v249 = vsel %vm247, %v225, 0
  %v252 = vsel %vm247, %v226, 0
  %254 = vmatprep.subr.bf16.mxu0 0
  %255 = vmatpush1.bf16.msra.mxu0 %v243
  %256 = vmatprep.subr.bf16.mxu0 0
  %257 = vmatpush1.bf16.msra.mxu0 %v244
  %258 = vmatprep.subr.bf16.mxu0 0
  %259 = vmatpush1.bf16.msra.mxu0 0
  %260 = vmatprep.subr.bf16.mxu0 0
  %261 = vmatpush1.bf16.msra.mxu0 0
  %262 = vmatprep.subr.bf16.mxu0 0
  %263 = vmatpush1.bf16.msra.mxu0 0
  %264 = vmatprep.subr.bf16.mxu0 0
  %265 = vmatpush1.bf16.msra.mxu0 0
  %266 = vmatprep.subr.bf16.mxu0 0
  %267 = vmatpush1.bf16.msra.mxu0 0
  %268 = vmatprep.subr.bf16.mxu0 0
  %269 = vmatpush1.bf16.msra.mxu0 0
  %270 = vmatprep.subr.bf16.mxu0 0
  %271 = vmatpush1.bf16.msra.mxu0 0
  %272 = vmatprep.subr.bf16.mxu0 0
  %273 = vmatpush1.bf16.msra.mxu0 0
  %274 = vmatprep.subr.bf16.mxu0 0
  %275 = vmatpush1.bf16.msra.mxu0 0
  %276 = vmatprep.subr.bf16.mxu0 0
  %277 = vmatpush1.bf16.msra.mxu0 0
  %278 = vmatprep.subr.bf16.mxu0 0
  %279 = vmatpush1.bf16.msra.mxu0 0
  %280 = vmatprep.subr.bf16.mxu0 0
  %281 = vmatpush1.bf16.msra.mxu0 0
  %282 = vmatprep.subr.bf16.mxu0 0
  %283 = vmatpush1.bf16.msra.mxu0 0
  %284 = vmatprep.subr.bf16.mxu0 0
  %285 = vmatpush1.bf16.msra.mxu0 0
  %286 = vmatprep.mubr.bf16.mxu0 0
  %287 = vmatmul.mubr.bf16.gmra.mrb[0].mxu0 %v249
  %v288 = vpop.f32.mrb[0].mxu0
  %v289 = vadd.f32 0.0, %v288
  %v290 = vpop.f32.mrb[0].mxu0
  %v291 = vpop.f32.mrb[0].mxu0
  %v292 = vadd.f32 0.0, %v291
  %v293 = vpop.f32.mrb[0].mxu0
  %294 = vmatprep.mubr.bf16.mxu0 0
  %295 = vmatmul.mubr.bf16.gmra.mrb[0].mxu0 %v252
  %v296 = vpop.f32.mrb[0].mxu0
  %v297 = vadd.f32 0.0, %v296
  %v298 = vpop.f32.mrb[0].mxu0
  %v299 = vpop.f32.mrb[0].mxu0
  %v300 = vadd.f32 0.0, %v299
  %v301 = vpop.f32.mrb[0].mxu0
  %302 = vdwg.mxu0
  %v307 = vunpack.c.l.b16 %v227
  %v308 = vunpack.c.l.b16 %v228
  %v309 = vunpack.c.l.b16 %v229
  %v310 = vunpack.c.l.b16 %v230
  %v311 = vpack.c.b16 %v308, %v307
  %v312 = vpack.c.b16 %v310, %v309
  %v316 = vsel %vm247, %v158, 0
  %v319 = vsel %vm247, %v159, 0
  %321 = vmatprep.subr.bf16.mxu0 0
  %322 = vmatpush1.bf16.msra.mxu0 %v311
  %323 = vmatprep.subr.bf16.mxu0 0
  %324 = vmatpush1.bf16.msra.mxu0 %v312
  %325 = vmatprep.subr.bf16.mxu0 0
  %326 = vmatpush1.bf16.msra.mxu0 0
  %327 = vmatprep.subr.bf16.mxu0 0
  %328 = vmatpush1.bf16.msra.mxu0 0
  %329 = vmatprep.subr.bf16.mxu0 0
  %330 = vmatpush1.bf16.msra.mxu0 0
  %331 = vmatprep.subr.bf16.mxu0 0
  %332 = vmatpush1.bf16.msra.mxu0 0
  %333 = vmatprep.subr.bf16.mxu0 0
  %334 = vmatpush1.bf16.msra.mxu0 0
  %335 = vmatprep.subr.bf16.mxu0 0
  %336 = vmatpush1.bf16.msra.mxu0 0
  %337 = vmatprep.subr.bf16.mxu0 0
  %338 = vmatpush1.bf16.msra.mxu0 0
  %339 = vmatprep.subr.bf16.mxu0 0
  %340 = vmatpush1.bf16.msra.mxu0 0
  %341 = vmatprep.subr.bf16.mxu0 0
  %342 = vmatpush1.bf16.msra.mxu0 0
  %343 = vmatprep.subr.bf16.mxu0 0
  %344 = vmatpush1.bf16.msra.mxu0 0
  %345 = vmatprep.subr.bf16.mxu0 0
  %346 = vmatpush1.bf16.msra.mxu0 0
  %347 = vmatprep.subr.bf16.mxu0 0
  %348 = vmatpush1.bf16.msra.mxu0 0
  %349 = vmatprep.subr.bf16.mxu0 0
  %350 = vmatpush1.bf16.msra.mxu0 0
  %351 = vmatprep.subr.bf16.mxu0 0
  %352 = vmatpush1.bf16.msra.mxu0 0
  %353 = vmatprep.mubr.bf16.mxu0 0
  %354 = vmatmul.mubr.bf16.gmra.mrb[0].mxu0 %v316
  %v355 = vpop.f32.mrb[0].mxu0
  %v356 = vadd.f32 %v289, %v355
  %v357 = vpop.f32.mrb[0].mxu0
  %v358 = vpop.f32.mrb[0].mxu0
  %v359 = vadd.f32 %v292, %v358
  %v360 = vpop.f32.mrb[0].mxu0
  %361 = vmatprep.mubr.bf16.mxu0 0
  %362 = vmatmul.mubr.bf16.gmra.mrb[0].mxu0 %v319
  %v363 = vpop.f32.mrb[0].mxu0
  %v364 = vadd.f32 %v297, %v363
  %v365 = vpop.f32.mrb[0].mxu0
  %v366 = vpop.f32.mrb[0].mxu0
  %v367 = vadd.f32 %v300, %v366
  %v368 = vpop.f32.mrb[0].mxu0
  %369 = vdwg.mxu0
  %v370 = vld [vmem:[%s3] sm:$0xff]
  %v371 = vld [vmem:[%s3 + $0x8] sm:$0xff]
  %v372 = vld [vmem:[%s3 + $0x10] sm:$0xff]
  %v373 = vld [vmem:[%s3 + $0x18] sm:$0xff]
  %v374 = vld [vmem:[%s4] sm:$0x1]
  %v375 = vmul.f32 %v370, 0.2
  %v376 = vmul.f32 %v371, 0.2
  %v377 = vmul.f32 %v372, 0.2
  %v378 = vmul.f32 %v373, 0.2
  %vm379 = vcmp.gt.f32.partialorder %v375, 1e-12
  %vm380 = vcmp.gt.f32.partialorder %v376, 1e-12
  %vm381 = vcmp.gt.f32.partialorder %v377, 1e-12
  %vm382 = vcmp.gt.f32.partialorder %v378, 1e-12
  %v383 = vsel %vm379, %v375, 1.0
  %v384 = vsel %vm380, %v376, 1.0
  %v385 = vsel %vm381, %v377, 1.0
  %v386 = vsel %vm382, %v378, 1.0
  %v387 = vrcp.pop %v383
  %v388 = vrcp.pop %v384
  %v389 = vrcp.pop %v385
  %v390 = vrcp.pop %v386
  %v391 = vmul.f32 %v383, %v383
  %v392 = vmul.f32 %v384, %v384
  %v393 = vmul.f32 %v385, %v385
  %v394 = vmul.f32 %v386, %v386
  %v395 = vmul.f32 %v391, %v391
  %v396 = vmul.f32 %v392, %v392
  %v397 = vmul.f32 %v393, %v393
  %v398 = vmul.f32 %v394, %v394
  %v399 = vmul.f32 %v395, %v383
  %v400 = vmul.f32 %v396, %v384
  %v401 = vmul.f32 %v397, %v385
  %v402 = vmul.f32 %v398, %v386
  %v403 = vmul.f32 %v399, %v383
  %v404 = vmul.f32 %v400, %v384
  %v405 = vmul.f32 %v401, %v385
  %v406 = vmul.f32 %v402, %v386
  %v407 = vmul.f32 %v395, -21.0
  %v408 = vmul.f32 %v396, -21.0
  %v409 = vmul.f32 %v397, -21.0
  %v410 = vmul.f32 %v398, -21.0
  %v411 = vadd.f32 %v387, %v407
  %v412 = vadd.f32 %v388, %v408
  %v413 = vadd.f32 %v389, %v409
  %v414 = vadd.f32 %v390, %v410
  %v415 = vmul.f32 %v399, 35.0
  %v416 = vmul.f32 %v400, 35.0
  %v417 = vmul.f32 %v401, 35.0
  %v418 = vmul.f32 %v402, 35.0
  %v419 = vadd.f32 %v411, %v415
  %v420 = vadd.f32 %v412, %v416
  %v421 = vadd.f32 %v413, %v417
  %v422 = vadd.f32 %v414, %v418
  %v423 = vmul.f32 %v403, -15.0
  %v424 = vmul.f32 %v404, -15.0
  %v425 = vmul.f32 %v405, -15.0
  %v426 = vmul.f32 %v406, -15.0
  %v427 = vadd.f32 %v419, %v423
  %v428 = vadd.f32 %v420, %v424
  %v429 = vadd.f32 %v421, %v425
  %v430 = vadd.f32 %v422, %v426
  %v432 = vlaneseq
  %v433 = vshrl.u32 %v432, 7
  %v434 = vsub.s32 0, %v433
  %v435 = vrot.slane %v374, %v434
  %438 = vset.pattern.permute.xlu0 0
  %439 = vperm.xlu0 %438, %v383
  %v440 = vpop.permute.xlu0 %439
  %443 = vset.pattern.permute.xlu0 0
  %444 = vperm.xlu0 %443, %v384
  %v445 = vpop.permute.xlu0 %444
  %448 = vset.pattern.permute.xlu0 0
  %449 = vperm.xlu0 %448, %v385
  %v450 = vpop.permute.xlu0 %449
  %453 = vset.pattern.permute.xlu0 0
  %454 = vperm.xlu0 %453, %v386
  %v455 = vpop.permute.xlu0 %454
  %v457 = vmul.f32 %v435, %v440
  %v458 = vmul.f32 %v435, %v445
  %v459 = vmul.f32 %v435, %v450
  %v460 = vmul.f32 %v435, %v455
  %v461 = vand.u32 2147483647, %v457
  %vm462 = vcmp.le.f32.partialorder %v461, 0.7853982
  %vm463 = vcmp.lt.s32.totalorder %v457, 0
  %v464 = vand.u32 %v457, 2139095040
  %v465 = vshrl.u32 %v464, 23
  %v466 = vsub.s32 %v465, 127
  %v467 = vand.u32 2147483647, %v457
  %v468 = vand.u32 %v467, 8388607
  %v469 = vor.u32 %v468, 8388608
  %v470 = vsub.s32 0, %v469
  %v471 = vadd.s32 %v466, 1
  %vm472 = vcmp.gt.s32.totalorder %v471, 0
  %v473 = vsel %vm472, %v471, 0
  %v474 = vshrl.u32 %v473, 5
  %v475 = vand.u32 %v473, 31
  %v476 = vsub.s32 32, %v475
  %v477 = vshrl.u32 683565275, %v476
  %v478 = vshll.u32 683565275, %v475
  %v479 = vshrl.u32 2475754826, %v476
  %v480 = vor.u32 %v478, %v479
  %v481 = vshll.u32 2475754826, %v475
  %v482 = vshrl.u32 2131351028, %v476
  %v483 = vor.u32 %v481, %v482
  %v484 = vshll.u32 2131351028, %v475
  %v485 = vshrl.u32 2102212464, %v476
  %v486 = vor.u32 %v484, %v485
  %v487 = vshll.u32 2102212464, %v475
  %v488 = vshrl.u32 920167782, %v476
  %v489 = vor.u32 %v487, %v488
  %v490 = vshll.u32 920167782, %v475
  %v491 = vshrl.u32 1326507024, %v476
  %v492 = vor.u32 %v490, %v491
  %vm493 = vcmp.lt.s32.totalorder %v474, 1
  %vm494 = vcmp.lt.s32.totalorder %v474, 2
  %vm495 = vcmp.lt.s32.totalorder %v474, 3
  %vm496 = vcmp.lt.s32.totalorder %v474, 4
  %v497 = vsel %vm493, %v477, %v480
  %v498 = vsel %vm496, %v486, 2102212464
  %v499 = vsel %vm495, %v483, %v498
  %v500 = vsel %vm494, %v497, %v499
  %v501 = vsel %vm493, %v480, %v483
  %v502 = vsel %vm496, %v489, 920167782
  %v503 = vsel %vm495, %v486, %v502
  %v504 = vsel %vm494, %v501, %v503
  %v505 = vsel %vm493, %v483, %v486
  %v506 = vsel %vm496, %v492, 1326507024
  %v507 = vsel %vm495, %v489, %v506
  %v508 = vsel %vm494, %v505, %v507
  %v509 = vshll.u32 %v469, 8
  %v510 = vmul.u32.u64.compose %v509, %v508
  %v511 = vextract.low.u32 %v510
  %v512 = vextract.high.u32 %v510
  %v513 = vmul.u32.u64.compose %v509, %v504
  %v514 = vextract.low.u32 %v513
  %v515 = vextract.high.u32 %v513
  %v516 = vmul.u32 %v509, %v500
  %v517 = vadd.s32 %v512, %v514
  %vm518 = vc.u32 %v512, %v514
  %v519 = vadd.s32 %v515, 1
  %v520 = vsel %vm518, %v519, %v515
  %v521 = vadd.s32 %v516, %v520
  %v522 = vadd.s32 %v521, 536870912
  %v523 = vshrl.u32 %v522, 30
  %v524 = vshll.u32 %v523, 30
  %v525 = vsub.s32 %v521, %v524
  %vm526 = vcmp.lt.s32.totalorder %v525, 0
  %v527 = vsub.s32 0, %v525
  %v528 = vsel %vm526, %v527, %v525
  %v529 = vclz %v528
  %v530 = vsub.s32 %v529, 2
  %vm531 = vcmp.gt.s32.totalorder 0, %v530
  %v532 = vsel %vm531, 0, %v530
  %v533 = vsub.s32 32, %v532
  %v534 = vshll.u32 %v525, %v532
  %v535 = vshrl.u32 %v517, %v533
  %v536 = vor.u32 %v534, %v535
  %v537 = vsub.s32 4294967266, %v532
  %v538 = vadd.s32 %v537, 127
  %v539 = vshll.u32 %v538, 23
  %v540 = vor.u32 4788187, %v539
  %v541 = vand.u32 2147483647, %v540
  %v543 = vcvt.s32.f32 %v536
  %v544 = vmul.f32 %v543, %v541
  %v545 = vxor.u32 %v544, 2147483648
  %v546 = vsel %vm463, %v545, %v544
  %v547 = vsub.s32 4, %v523
  %v548 = vsel %vm463, %v547, %v523
  %v549 = vsel %vm462, %v457, %v546
  %v550 = vsel %vm462, 0, %v548
  %v551 = vcosq.f32.pop %v549
  %v552 = vsinq.f32.pop %v549
  %vm553 = vweird.f32 %v457
  %v554 = vadd.s32 %v550, 3
  %v555 = vand.u32 %v554, 3
  %vm556 = vcmp.lt.s32.totalorder %v555, 2
  %vm557 = vcmp.eq.s32.totalorder %v555, 0
  %v558 = vxor.u32 %v552, 2147483648
  %v559 = vsel %vm557, %v551, %v558
  %vm560 = vcmp.eq.s32.totalorder %v555, 2
  %v561 = vxor.u32 %v551, 2147483648
  %v562 = vsel %vm560, %v561, %v552
  %v563 = vsel %vm556, %v559, %v562
  %v564 = vsel %vm553, nan, %v563
  %v565 = vand.u32 2147483647, %v458
  %vm566 = vcmp.le.f32.partialorder %v565, 0.7853982
  %vm567 = vcmp.lt.s32.totalorder %v458, 0
  %v568 = vand.u32 %v458, 2139095040
  %v569 = vshrl.u32 %v568, 23
  %v570 = vsub.s32 %v569, 127
  %v571 = vand.u32 2147483647, %v458
  %v572 = vand.u32 %v571, 8388607
  %v573 = vor.u32 %v572, 8388608
  %v574 = vsub.s32 0, %v573
  %v575 = vadd.s32 %v570, 1
  %vm576 = vcmp.gt.s32.totalorder %v575, 0
  %v577 = vsel %vm576, %v575, 0
  %v578 = vshrl.u32 %v577, 5
  %v579 = vand.u32 %v577, 31
  %v580 = vsub.s32 32, %v579
  %v581 = vshrl.u32 683565275, %v580
  %v582 = vshll.u32 683565275, %v579
  %v583 = vshrl.u32 2475754826, %v580
  %v584 = vor.u32 %v582, %v583
  %v585 = vshll.u32 2475754826, %v579
  %v586 = vshrl.u32 2131351028, %v580
  %v587 = vor.u32 %v585, %v586
  %v588 = vshll.u32 2131351028, %v579
  %v589 = vshrl.u32 2102212464, %v580
  %v590 = vor.u32 %v588, %v589
  %v591 = vshll.u32 2102212464, %v579
  %v592 = vshrl.u32 920167782, %v580
  %v593 = vor.u32 %v591, %v592
  %v594 = vshll.u32 920167782, %v579
  %v595 = vshrl.u32 1326507024, %v580
  %v596 = vor.u32 %v594, %v595
  %vm597 = vcmp.lt.s32.totalorder %v578, 1
  %vm598 = vcmp.lt.s32.totalorder %v578, 2
  %vm599 = vcmp.lt.s32.totalorder %v578, 3
  %vm600 = vcmp.lt.s32.totalorder %v578, 4
  %v601 = vsel %vm597, %v581, %v584
  %v602 = vsel %vm600, %v590, 2102212464
  %v603 = vsel %vm599, %v587, %v602
  %v604 = vsel %vm598, %v601, %v603
  %v605 = vsel %vm597, %v584, %v587
  %v606 = vsel %vm600, %v593, 920167782
  %v607 = vsel %vm599, %v590, %v606
  %v608 = vsel %vm598, %v605, %v607
  %v609 = vsel %vm597, %v587, %v590
  %v610 = vsel %vm600, %v596, 1326507024
  %v611 = vsel %vm599, %v593, %v610
  %v612 = vsel %vm598, %v609, %v611
  %v613 = vshll.u32 %v573, 8
  %v614 = vmul.u32.u64.compose %v613, %v612
  %v615 = vextract.low.u32 %v614
  %v616 = vextract.high.u32 %v614
  %v617 = vmul.u32.u64.compose %v613, %v608
  %v618 = vextract.low.u32 %v617
  %v619 = vextract.high.u32 %v617
  %v620 = vmul.u32 %v613, %v604
  %v621 = vadd.s32 %v616, %v618
  %vm622 = vc.u32 %v616, %v618
  %v623 = vadd.s32 %v619, 1
  %v624 = vsel %vm622, %v623, %v619
  %v625 = vadd.s32 %v620, %v624
  %v626 = vadd.s32 %v625, 536870912
  %v627 = vshrl.u32 %v626, 30
  %v628 = vshll.u32 %v627, 30
  %v629 = vsub.s32 %v625, %v628
  %vm630 = vcmp.lt.s32.totalorder %v629, 0
  %v631 = vsub.s32 0, %v629
  %v632 = vsel %vm630, %v631, %v629
  %v633 = vclz %v632
  %v634 = vsub.s32 %v633, 2
  %vm635 = vcmp.gt.s32.totalorder 0, %v634
  %v636 = vsel %vm635, 0, %v634
  %v637 = vsub.s32 32, %v636
  %v638 = vshll.u32 %v629, %v636
  %v639 = vshrl.u32 %v621, %v637
  %v640 = vor.u32 %v638, %v639
  %v641 = vsub.s32 4294967266, %v636
  %v642 = vadd.s32 %v641, 127
  %v643 = vshll.u32 %v642, 23
  %v644 = vor.u32 4788187, %v643
  %v645 = vand.u32 2147483647, %v644
  %v647 = vcvt.s32.f32 %v640
  %v648 = vmul.f32 %v647, %v645
  %v649 = vxor.u32 %v648, 2147483648
  %v650 = vsel %vm567, %v649, %v648
  %v651 = vsub.s32 4, %v627
  %v652 = vsel %vm567, %v651, %v627
  %v653 = vsel %vm566, %v458, %v650
  %v654 = vsel %vm566, 0, %v652
  %v655 = vcosq.f32.pop %v653
  %v656 = vsinq.f32.pop %v653
  %vm657 = vweird.f32 %v458
  %v658 = vadd.s32 %v654, 3
  %v659 = vand.u32 %v658, 3
  %vm660 = vcmp.lt.s32.totalorder %v659, 2
  %vm661 = vcmp.eq.s32.totalorder %v659, 0
  %v662 = vxor.u32 %v656, 2147483648
  %v663 = vsel %vm661, %v655, %v662
  %vm664 = vcmp.eq.s32.totalorder %v659, 2
  %v665 = vxor.u32 %v655, 2147483648
  %v666 = vsel %vm664, %v665, %v656
  %v667 = vsel %vm660, %v663, %v666
  %v668 = vsel %vm657, nan, %v667
  %v669 = vand.u32 2147483647, %v459
  %vm670 = vcmp.le.f32.partialorder %v669, 0.7853982
  %vm671 = vcmp.lt.s32.totalorder %v459, 0
  %v672 = vand.u32 %v459, 2139095040
  %v673 = vshrl.u32 %v672, 23
  %v674 = vsub.s32 %v673, 127
  %v675 = vand.u32 2147483647, %v459
  %v676 = vand.u32 %v675, 8388607
  %v677 = vor.u32 %v676, 8388608
  %v678 = vsub.s32 0, %v677
  %v679 = vadd.s32 %v674, 1
  %vm680 = vcmp.gt.s32.totalorder %v679, 0
  %v681 = vsel %vm680, %v679, 0
  %v682 = vshrl.u32 %v681, 5
  %v683 = vand.u32 %v681, 31
  %v684 = vsub.s32 32, %v683
  %v685 = vshrl.u32 683565275, %v684
  %v686 = vshll.u32 683565275, %v683
  %v687 = vshrl.u32 2475754826, %v684
  %v688 = vor.u32 %v686, %v687
  %v689 = vshll.u32 2475754826, %v683
  %v690 = vshrl.u32 2131351028, %v684
  %v691 = vor.u32 %v689, %v690
  %v692 = vshll.u32 2131351028, %v683
  %v693 = vshrl.u32 2102212464, %v684
  %v694 = vor.u32 %v692, %v693
  %v695 = vshll.u32 2102212464, %v683
  %v696 = vshrl.u32 920167782, %v684
  %v697 = vor.u32 %v695, %v696
  %v698 = vshll.u32 920167782, %v683
  %v699 = vshrl.u32 1326507024, %v684
  %v700 = vor.u32 %v698, %v699
  %vm701 = vcmp.lt.s32.totalorder %v682, 1
  %vm702 = vcmp.lt.s32.totalorder %v682, 2
  %vm703 = vcmp.lt.s32.totalorder %v682, 3
  %vm704 = vcmp.lt.s32.totalorder %v682, 4
  %v705 = vsel %vm701, %v685, %v688
  %v706 = vsel %vm704, %v694, 2102212464
  %v707 = vsel %vm703, %v691, %v706
  %v708 = vsel %vm702, %v705, %v707
  %v709 = vsel %vm701, %v688, %v691
  %v710 = vsel %vm704, %v697, 920167782
  %v711 = vsel %vm703, %v694, %v710
  %v712 = vsel %vm702, %v709, %v711
  %v713 = vsel %vm701, %v691, %v694
  %v714 = vsel %vm704, %v700, 1326507024
  %v715 = vsel %vm703, %v697, %v714
  %v716 = vsel %vm702, %v713, %v715
  %v717 = vshll.u32 %v677, 8
  %v718 = vmul.u32.u64.compose %v717, %v716
  %v719 = vextract.low.u32 %v718
  %v720 = vextract.high.u32 %v718
  %v721 = vmul.u32.u64.compose %v717, %v712
  %v722 = vextract.low.u32 %v721
  %v723 = vextract.high.u32 %v721
  %v724 = vmul.u32 %v717, %v708
  %v725 = vadd.s32 %v720, %v722
  %vm726 = vc.u32 %v720, %v722
  %v727 = vadd.s32 %v723, 1
  %v728 = vsel %vm726, %v727, %v723
  %v729 = vadd.s32 %v724, %v728
  %v730 = vadd.s32 %v729, 536870912
  %v731 = vshrl.u32 %v730, 30
  %v732 = vshll.u32 %v731, 30
  %v733 = vsub.s32 %v729, %v732
  %vm734 = vcmp.lt.s32.totalorder %v733, 0
  %v735 = vsub.s32 0, %v733
  %v736 = vsel %vm734, %v735, %v733
  %v737 = vclz %v736
  %v738 = vsub.s32 %v737, 2
  %vm739 = vcmp.gt.s32.totalorder 0, %v738
  %v740 = vsel %vm739, 0, %v738
  %v741 = vsub.s32 32, %v740
  %v742 = vshll.u32 %v733, %v740
  %v743 = vshrl.u32 %v725, %v741
  %v744 = vor.u32 %v742, %v743
  %v745 = vsub.s32 4294967266, %v740
  %v746 = vadd.s32 %v745, 127
  %v747 = vshll.u32 %v746, 23
  %v748 = vor.u32 4788187, %v747
  %v749 = vand.u32 2147483647, %v748
  %v751 = vcvt.s32.f32 %v744
  %v752 = vmul.f32 %v751, %v749
  %v753 = vxor.u32 %v752, 2147483648
  %v754 = vsel %vm671, %v753, %v752
  %v755 = vsub.s32 4, %v731
  %v756 = vsel %vm671, %v755, %v731
  %v757 = vsel %vm670, %v459, %v754
  %v758 = vsel %vm670, 0, %v756
  %v759 = vcosq.f32.pop %v757
  %v760 = vsinq.f32.pop %v757
  %vm761 = vweird.f32 %v459
  %v762 = vadd.s32 %v758, 3
  %v763 = vand.u32 %v762, 3
  %vm764 = vcmp.lt.s32.totalorder %v763, 2
  %vm765 = vcmp.eq.s32.totalorder %v763, 0
  %v766 = vxor.u32 %v760, 2147483648
  %v767 = vsel %vm765, %v759, %v766
  %vm768 = vcmp.eq.s32.totalorder %v763, 2
  %v769 = vxor.u32 %v759, 2147483648
  %v770 = vsel %vm768, %v769, %v760
  %v771 = vsel %vm764, %v767, %v770
  %v772 = vsel %vm761, nan, %v771
  %v773 = vand.u32 2147483647, %v460
  %vm774 = vcmp.le.f32.partialorder %v773, 0.7853982
  %vm775 = vcmp.lt.s32.totalorder %v460, 0
  %v776 = vand.u32 %v460, 2139095040
  %v777 = vshrl.u32 %v776, 23
  %v778 = vsub.s32 %v777, 127
  %v779 = vand.u32 2147483647, %v460
  %v780 = vand.u32 %v779, 8388607
  %v781 = vor.u32 %v780, 8388608
  %v782 = vsub.s32 0, %v781
  %v783 = vadd.s32 %v778, 1
  %vm784 = vcmp.gt.s32.totalorder %v783, 0
  %v785 = vsel %vm784, %v783, 0
  %v786 = vshrl.u32 %v785, 5
  %v787 = vand.u32 %v785, 31
  %v788 = vsub.s32 32, %v787
  %v789 = vshrl.u32 683565275, %v788
  %v790 = vshll.u32 683565275, %v787
  %v791 = vshrl.u32 2475754826, %v788
  %v792 = vor.u32 %v790, %v791
  %v793 = vshll.u32 2475754826, %v787
  %v794 = vshrl.u32 2131351028, %v788
  %v795 = vor.u32 %v793, %v794
  %v796 = vshll.u32 2131351028, %v787
  %v797 = vshrl.u32 2102212464, %v788
  %v798 = vor.u32 %v796, %v797
  %v799 = vshll.u32 2102212464, %v787
  %v800 = vshrl.u32 920167782, %v788
  %v801 = vor.u32 %v799, %v800
  %v802 = vshll.u32 920167782, %v787
  %v803 = vshrl.u32 1326507024, %v788
  %v804 = vor.u32 %v802, %v803
  %vm805 = vcmp.lt.s32.totalorder %v786, 1
  %vm806 = vcmp.lt.s32.totalorder %v786, 2
  %vm807 = vcmp.lt.s32.totalorder %v786, 3
  %vm808 = vcmp.lt.s32.totalorder %v786, 4
  %v809 = vsel %vm805, %v789, %v792
  %v810 = vsel %vm808, %v798, 2102212464
  %v811 = vsel %vm807, %v795, %v810
  %v812 = vsel %vm806, %v809, %v811
  %v813 = vsel %vm805, %v792, %v795
  %v814 = vsel %vm808, %v801, 920167782
  %v815 = vsel %vm807, %v798, %v814
  %v816 = vsel %vm806, %v813, %v815
  %v817 = vsel %vm805, %v795, %v798
  %v818 = vsel %vm808, %v804, 1326507024
  %v819 = vsel %vm807, %v801, %v818
  %v820 = vsel %vm806, %v817, %v819
  %v821 = vshll.u32 %v781, 8
  %v822 = vmul.u32.u64.compose %v821, %v820
  %v823 = vextract.low.u32 %v822
  %v824 = vextract.high.u32 %v822
  %v825 = vmul.u32.u64.compose %v821, %v816
  %v826 = vextract.low.u32 %v825
  %v827 = vextract.high.u32 %v825
  %v828 = vmul.u32 %v821, %v812
  %v829 = vadd.s32 %v824, %v826
  %vm830 = vc.u32 %v824, %v826
  %v831 = vadd.s32 %v827, 1
  %v832 = vsel %vm830, %v831, %v827
  %v833 = vadd.s32 %v828, %v832
  %v834 = vadd.s32 %v833, 536870912
  %v835 = vshrl.u32 %v834, 30
  %v836 = vshll.u32 %v835, 30
  %v837 = vsub.s32 %v833, %v836
  %vm838 = vcmp.lt.s32.totalorder %v837, 0
  %v839 = vsub.s32 0, %v837
  %v840 = vsel %vm838, %v839, %v837
  %v841 = vclz %v840
  %v842 = vsub.s32 %v841, 2
  %vm843 = vcmp.gt.s32.totalorder 0, %v842
  %v844 = vsel %vm843, 0, %v842
  %v845 = vsub.s32 32, %v844
  %v846 = vshll.u32 %v837, %v844
  %v847 = vshrl.u32 %v829, %v845
  %v848 = vor.u32 %v846, %v847
  %v849 = vsub.s32 4294967266, %v844
  %v850 = vadd.s32 %v849, 127
  %v851 = vshll.u32 %v850, 23
  %v852 = vor.u32 4788187, %v851
  %v853 = vand.u32 2147483647, %v852
  %v855 = vcvt.s32.f32 %v848
  %v856 = vmul.f32 %v855, %v853
  %v857 = vxor.u32 %v856, 2147483648
  %v858 = vsel %vm775, %v857, %v856
  %v859 = vsub.s32 4, %v835
  %v860 = vsel %vm775, %v859, %v835
  %v861 = vsel %vm774, %v460, %v858
  %v862 = vsel %vm774, 0, %v860
  %v863 = vcosq.f32.pop %v861
  %v864 = vsinq.f32.pop %v861
  %vm865 = vweird.f32 %v460
  %v866 = vadd.s32 %v862, 3
  %v867 = vand.u32 %v866, 3
  %vm868 = vcmp.lt.s32.totalorder %v867, 2
  %vm869 = vcmp.eq.s32.totalorder %v867, 0
  %v870 = vxor.u32 %v864, 2147483648
  %v871 = vsel %vm869, %v863, %v870
  %vm872 = vcmp.eq.s32.totalorder %v867, 2
  %v873 = vxor.u32 %v863, 2147483648
  %v874 = vsel %vm872, %v873, %v864
  %v875 = vsel %vm868, %v871, %v874
  %v876 = vsel %vm865, nan, %v875
  %878 = vset.pattern.permute.xlu0 0
  %879 = vperm.xlu0 %878, %v427
  %v880 = vpop.permute.xlu0 %879
  %883 = vset.pattern.permute.xlu0 0
  %884 = vperm.xlu0 %883, %v428
  %v885 = vpop.permute.xlu0 %884
  %888 = vset.pattern.permute.xlu0 0
  %889 = vperm.xlu0 %888, %v429
  %v890 = vpop.permute.xlu0 %889
  %893 = vset.pattern.permute.xlu0 0
  %894 = vperm.xlu0 %893, %v430
  %v895 = vpop.permute.xlu0 %894
  %v897 = vmul.f32 %v880, %v564
  %v898 = vmul.f32 %v885, %v668
  %v899 = vmul.f32 %v890, %v772
  %v900 = vmul.f32 %v895, %v876
  %v901 = vsel %vm379, 1, 0
  %v902 = vsel %vm380, 1, 0
  %v903 = vsel %vm381, 1, 0
  %v904 = vsel %vm382, 1, 0
  %905 = vset.pattern.permute.xlu0 0
  %906 = vperm.xlu0 %905, %v901
  %v907 = vpop.permute.xlu0 %906
  %908 = vset.pattern.permute.xlu0 0
  %909 = vperm.xlu0 %908, %v902
  %v910 = vpop.permute.xlu0 %909
  %911 = vset.pattern.permute.xlu0 0
  %912 = vperm.xlu0 %911, %v903
  %v913 = vpop.permute.xlu0 %912
  %914 = vset.pattern.permute.xlu0 0
  %915 = vperm.xlu0 %914, %v904
  %v916 = vpop.permute.xlu0 %915
  %vm917 = vcmp.eq.s32.totalorder %v907, 1
  %vm918 = vcmp.eq.s32.totalorder %v910, 1
  %vm919 = vcmp.eq.s32.totalorder %v913, 1
  %vm920 = vcmp.eq.s32.totalorder %v916, 1
  %v921 = vsel %vm917, %v897, 0.0
  %v922 = vsel %vm918, %v898, 0.0
  %v923 = vsel %vm919, %v899, 0.0
  %v924 = vsel %vm920, %v900, 0.0
  %v925 = vpack.c.bf16 %v922, %v921
  %v926 = vpack.c.bf16 %v924, %v923
  %v927 = vld [vmem:[%s8] sm:$0xf]
  %vm928 = vcmask 64512
  %v930 = vsel %vm928, %v925, 0
  %v933 = vsel %vm928, %v926, 0
  %vm935 = vcmask 1043456
  %v937 = vsel %vm935, %v927, 0
  %939 = vmatprep.subr.bf16.mxu0 0
  %940 = vmatpush1.bf16.msra.mxu0 %v937
  %941 = vmatprep.subr.bf16.mxu0 0
  %942 = vmatpush1.bf16.msra.mxu0 0
  %943 = vmatprep.subr.bf16.mxu0 0
  %944 = vmatpush1.bf16.msra.mxu0 0
  %945 = vmatprep.subr.bf16.mxu0 0
  %946 = vmatpush1.bf16.msra.mxu0 0
  %947 = vmatprep.subr.bf16.mxu0 0
  %948 = vmatpush1.bf16.msra.mxu0 0
  %949 = vmatprep.subr.bf16.mxu0 0
  %950 = vmatpush1.bf16.msra.mxu0 0
  %951 = vmatprep.subr.bf16.mxu0 0
  %952 = vmatpush1.bf16.msra.mxu0 0
  %953 = vmatprep.subr.bf16.mxu0 0
  %954 = vmatpush1.bf16.msra.mxu0 0
  %955 = vmatprep.subr.bf16.mxu0 0
  %956 = vmatpush1.bf16.msra.mxu0 0
  %957 = vmatprep.subr.bf16.mxu0 0
  %958 = vmatpush1.bf16.msra.mxu0 0
  %959 = vmatprep.subr.bf16.mxu0 0
  %960 = vmatpush1.bf16.msra.mxu0 0
  %961 = vmatprep.subr.bf16.mxu0 0
  %962 = vmatpush1.bf16.msra.mxu0 0
  %963 = vmatprep.subr.bf16.mxu0 0
  %964 = vmatpush1.bf16.msra.mxu0 0
  %965 = vmatprep.subr.bf16.mxu0 0
  %966 = vmatpush1.bf16.msra.mxu0 0
  %967 = vmatprep.subr.bf16.mxu0 0
  %968 = vmatpush1.bf16.msra.mxu0 0
  %969 = vmatprep.subr.bf16.mxu0 0
  %970 = vmatpush1.bf16.msra.mxu0 0
  %971 = vmatprep.mubr.bf16.mxu0 0
  %972 = vmatmul.mubr.bf16.gmra.mrb[0].mxu0 %v930
  %v973 = vpop.f32.mrb[0].mxu0
  %v974 = vadd.f32 0.0, %v973
  %v975 = vpop.f32.mrb[0].mxu0
  %v976 = vpop.f32.mrb[0].mxu0
  %v977 = vadd.f32 0.0, %v976
  %v978 = vpop.f32.mrb[0].mxu0
  %979 = vmatprep.mubr.bf16.mxu0 0
  %980 = vmatmul.mubr.bf16.gmra.mrb[0].mxu0 %v933
  %v981 = vpop.f32.mrb[0].mxu0
  %v982 = vadd.f32 0.0, %v981
  %v983 = vpop.f32.mrb[0].mxu0
  %v984 = vpop.f32.mrb[0].mxu0
  %v985 = vadd.f32 0.0, %v984
  %v986 = vpop.f32.mrb[0].mxu0
  %987 = vdwg.mxu0
  %v988 = vadd.f32 %v356, %v974
  %v989 = vadd.f32 %v359, %v977
  %v990 = vadd.f32 %v364, %v982
  %v991 = vadd.f32 %v367, %v985
  %v992 = vld [vmem:[%s9] sm:$0x1]
  %v994 = vlaneseq
  %v995 = vshrl.u32 %v994, 7
  %v996 = vsub.s32 0, %v995
  %v997 = vrot.slane %v992, %v996
  %v999 = vadd.f32 %v988, %v997
  %v1000 = vadd.f32 %v989, %v997
  %v1001 = vadd.f32 %v990, %v997
  %v1002 = vadd.f32 %v991, %v997
  %v1003 = vxor.u32 %v999, 2147483648
  %v1004 = vxor.u32 %v1000, 2147483648
  %v1005 = vxor.u32 %v1001, 2147483648
  %v1006 = vxor.u32 %v1002, 2147483648
  %v1007 = vmul.f32 %v1003, 1.442695
  %v1008 = vpow.pop %v1007
  %v1009 = vmul.f32 %v1004, 1.442695
  %v1010 = vpow.pop %v1009
  %v1011 = vmul.f32 %v1005, 1.442695
  %v1012 = vpow.pop %v1011
  %v1013 = vmul.f32 %v1006, 1.442695
  %v1014 = vpow.pop %v1013
  %v1015 = vadd.f32 %v1008, 1.0
  %v1016 = vadd.f32 %v1010, 1.0
  %v1017 = vadd.f32 %v1012, 1.0
  %v1018 = vadd.f32 %v1014, 1.0
  %v1019 = vrcp.pop %v1015
  %v1020 = vmul.f32 1.0, %v1019
  %v1021 = vrcp.pop %v1016
  %v1022 = vmul.f32 1.0, %v1021
  %v1023 = vrcp.pop %v1017
  %v1024 = vmul.f32 1.0, %v1023
  %v1025 = vrcp.pop %v1018
  %v1026 = vmul.f32 1.0, %v1025
  %v1027 = vmul.f32 %v999, %v1020
  %v1028 = vmul.f32 %v1000, %v1022
  %v1029 = vmul.f32 %v1001, %v1024
  %v1030 = vmul.f32 %v1002, %v1026
  %v1031 = vpack.c.bf16 %v1028, %v1027
  %v1032 = vpack.c.bf16 %v1030, %v1029
  %v1033 = vld [vmem:[%s10] sm:$0xf]
  %v1034 = vld [vmem:[%s10 + $0x4] sm:$0xf]
  %v1035 = vld [vmem:[%s10 + $0x8] sm:$0xf]
  %v1036 = vld [vmem:[%s10 + $0xc] sm:$0xf]
  %v1037 = vld [vmem:[%s10 + $0x10] sm:$0xf]
  %v1038 = vld [vmem:[%s10 + $0x14] sm:$0xf]
  %v1039 = vld [vmem:[%s10 + $0x18] sm:$0xf]
  %v1040 = vld [vmem:[%s10 + $0x1c] sm:$0xf]
  %v1041 = vld [vmem:[%s10 + $0x20] sm:$0xf]
  %v1042 = vld [vmem:[%s10 + $0x24] sm:$0xf]
  %v1043 = vld [vmem:[%s10 + $0x28] sm:$0xf]
  %v1044 = vld [vmem:[%s10 + $0x2c] sm:$0xf]
  %v1045 = vld [vmem:[%s10 + $0x30] sm:$0xf]
  %v1046 = vld [vmem:[%s10 + $0x34] sm:$0xf]
  %v1047 = vld [vmem:[%s10 + $0x38] sm:$0xf]
  %v1048 = vld [vmem:[%s10 + $0x3c] sm:$0xf]
  %v1049 = vld [vmem:[%s11] sm:$0x1]
  %v1051 = vlaneseq
  %v1052 = vshrl.u32 %v1051, 7
  %v1053 = vsub.s32 0, %v1052
  %v1054 = vrot.slane %v1049, %v1053
  %v1072 = vunpack.c.l.b16 %v1033
  %v1073 = vunpack.c.l.b16 %v1034
  %v1074 = vunpack.c.l.b16 %v1035
  %v1075 = vunpack.c.l.b16 %v1036
  %v1076 = vunpack.c.l.b16 %v1037
  %v1077 = vunpack.c.l.b16 %v1038
  %v1078 = vunpack.c.l.b16 %v1039
  %v1079 = vunpack.c.l.b16 %v1040
  %v1080 = vunpack.c.l.b16 %v1041
  %v1081 = vunpack.c.l.b16 %v1042
  %v1082 = vunpack.c.l.b16 %v1043
  %v1083 = vunpack.c.l.b16 %v1044
  %v1084 = vunpack.c.l.b16 %v1045
  %v1085 = vunpack.c.l.b16 %v1046
  %v1086 = vunpack.c.l.b16 %v1047
  %v1087 = vunpack.c.l.b16 %v1048
  %v1088 = vpack.c.b16 %v1073, %v1072
  %v1089 = vpack.c.b16 %v1075, %v1074
  %v1090 = vpack.c.b16 %v1077, %v1076
  %v1091 = vpack.c.b16 %v1079, %v1078
  %v1092 = vpack.c.b16 %v1081, %v1080
  %v1093 = vpack.c.b16 %v1083, %v1082
  %v1094 = vpack.c.b16 %v1085, %v1084
  %v1095 = vpack.c.b16 %v1087, %v1086
  %1104 = vmatprep.subr.bf16.mxu0 0
  %1105 = vmatpush1.bf16.msra.mxu0 %v1088
  %1106 = vmatprep.subr.bf16.mxu0 0
  %1107 = vmatpush1.bf16.msra.mxu0 %v1089
  %1108 = vmatprep.subr.bf16.mxu0 0
  %1109 = vmatpush1.bf16.msra.mxu0 %v1090
  %1110 = vmatprep.subr.bf16.mxu0 0
  %1111 = vmatpush1.bf16.msra.mxu0 %v1091
  %1112 = vmatprep.subr.bf16.mxu0 0
  %1113 = vmatpush1.bf16.msra.mxu0 %v1092
  %1114 = vmatprep.subr.bf16.mxu0 0
  %1115 = vmatpush1.bf16.msra.mxu0 %v1093
  %1116 = vmatprep.subr.bf16.mxu0 0
  %1117 = vmatpush1.bf16.msra.mxu0 %v1094
  %1118 = vmatprep.subr.bf16.mxu0 0
  %1119 = vmatpush1.bf16.msra.mxu0 %v1095
  %1120 = vmatprep.subr.bf16.mxu0 0
  %1121 = vmatpush1.bf16.msra.mxu0 0
  %1122 = vmatprep.subr.bf16.mxu0 0
  %1123 = vmatpush1.bf16.msra.mxu0 0
  %1124 = vmatprep.subr.bf16.mxu0 0
  %1125 = vmatpush1.bf16.msra.mxu0 0
  %1126 = vmatprep.subr.bf16.mxu0 0
  %1127 = vmatpush1.bf16.msra.mxu0 0
  %1128 = vmatprep.subr.bf16.mxu0 0
  %1129 = vmatpush1.bf16.msra.mxu0 0
  %1130 = vmatprep.subr.bf16.mxu0 0
  %1131 = vmatpush1.bf16.msra.mxu0 0
  %1132 = vmatprep.subr.bf16.mxu0 0
  %1133 = vmatpush1.bf16.msra.mxu0 0
  %1134 = vmatprep.subr.bf16.mxu0 0
  %1135 = vmatpush1.bf16.msra.mxu0 0
  %1136 = vmatprep.mubr.bf16.mxu0 0
  %1137 = vmatmul.mubr.bf16.gmra.mrb[0].mxu0 %v1031
  %v1138 = vpop.f32.mrb[0].mxu0
  %v1139 = vadd.f32 %v1054, %v1138
  %v1140 = vpop.f32.mrb[0].mxu0
  %v1141 = vpop.f32.mrb[0].mxu0
  %v1142 = vadd.f32 %v1054, %v1141
  %v1143 = vpop.f32.mrb[0].mxu0
  %1144 = vmatprep.mubr.bf16.mxu0 0
  %1145 = vmatmul.mubr.bf16.gmra.mrb[0].mxu0 %v1032
  %v1146 = vpop.f32.mrb[0].mxu0
  %v1147 = vadd.f32 %v1054, %v1146
  %v1148 = vpop.f32.mrb[0].mxu0
  %v1149 = vpop.f32.mrb[0].mxu0
  %v1150 = vadd.f32 %v1054, %v1149
  %v1151 = vpop.f32.mrb[0].mxu0
  %1152 = vdwg.mxu0
  %v1153 = vld [vmem:[%s1] sm:$0x1]
  %v1154 = vlaneseq
  %v1155 = vshrl.u32 %v1154, 7
  %v1156 = vadd.s32 %v1155, 8
  %v1157 = vlaneseq
  %v1158 = vshrl.u32 %v1157, 7
  %v1159 = vsub.s32 0, %v1158
  %v1160 = vrot.slane %v1153, %v1159
  %vm1161 = vcmp.eq.s32.totalorder %v1160, %v1155
  %vm1162 = vcmp.eq.s32.totalorder %v1160, %v1156
  %v1163 = vsel %vm1161, 1, 0
  %v1164 = vsel %vm1162, 1, 0
  %v1165 = vcvt.s32.f32 %v1163
  %v1166 = vcvt.s32.f32 %v1164
  %v1168 = vsel %vm247, %v1165, 0
  %v1171 = vsel %vm247, %v1166, 0
  %1173 = vmatprep.subr.mxu0 0.0
  %1174 = vmatpush1.msra.mxu0 %v1139
  %1175 = vmatprep.subr.mxu0 0.0
  %1176 = vmatpush1.msra.mxu0 %v1142
  %1177 = vmatprep.subr.mxu0 0.0
  %1178 = vmatpush1.msra.mxu0 %v1147
  %1179 = vmatprep.subr.mxu0 0.0
  %1180 = vmatpush1.msra.mxu0 %v1150
  %1181 = vmatprep.subr.mxu0 0.0
  %1182 = vmatpush1.msra.mxu0 0.0
  %1183 = vmatprep.subr.mxu0 0.0
  %1184 = vmatpush1.msra.mxu0 0.0
  %1185 = vmatprep.subr.mxu0 0.0
  %1186 = vmatpush1.msra.mxu0 0.0
  %1187 = vmatprep.subr.mxu0 0.0
  %1188 = vmatpush1.msra.mxu0 0.0
  %1189 = vmatprep.subr.mxu0 0.0
  %1190 = vmatpush1.msra.mxu0 0.0
  %1191 = vmatprep.subr.mxu0 0.0
  %1192 = vmatpush1.msra.mxu0 0.0
  %1193 = vmatprep.subr.mxu0 0.0
  %1194 = vmatpush1.msra.mxu0 0.0
  %1195 = vmatprep.subr.mxu0 0.0
  %1196 = vmatpush1.msra.mxu0 0.0
  %1197 = vmatprep.subr.mxu0 0.0
  %1198 = vmatpush1.msra.mxu0 0.0
  %1199 = vmatprep.subr.mxu0 0.0
  %1200 = vmatpush1.msra.mxu0 0.0
  %1201 = vmatprep.subr.mxu0 0.0
  %1202 = vmatpush1.msra.mxu0 0.0
  %1203 = vmatprep.subr.mxu0 0.0
  %1204 = vmatpush1.msra.mxu0 0.0
  %1205 = vmatprep.subr.mxu0 0.0
  %1206 = vmatpush1.msra.mxu0 0.0
  %1207 = vmatprep.subr.mxu0 0.0
  %1208 = vmatpush1.msra.mxu0 0.0
  %1209 = vmatprep.subr.mxu0 0.0
  %1210 = vmatpush1.msra.mxu0 0.0
  %1211 = vmatprep.subr.mxu0 0.0
  %1212 = vmatpush1.msra.mxu0 0.0
  %1213 = vmatprep.subr.mxu0 0.0
  %1214 = vmatpush1.msra.mxu0 0.0
  %1215 = vmatprep.subr.mxu0 0.0
  %1216 = vmatpush1.msra.mxu0 0.0
  %1217 = vmatprep.subr.mxu0 0.0
  %1218 = vmatpush1.msra.mxu0 0.0
  %1219 = vmatprep.subr.mxu0 0.0
  %1220 = vmatpush1.msra.mxu0 0.0
  %1221 = vmatprep.subr.mxu0 0.0
  %1222 = vmatpush1.msra.mxu0 0.0
  %1223 = vmatprep.subr.mxu0 0.0
  %1224 = vmatpush1.msra.mxu0 0.0
  %1225 = vmatprep.subr.mxu0 0.0
  %1226 = vmatpush1.msra.mxu0 0.0
  %1227 = vmatprep.subr.mxu0 0.0
  %1228 = vmatpush1.msra.mxu0 0.0
  %1229 = vmatprep.subr.mxu0 0.0
  %1230 = vmatpush1.msra.mxu0 0.0
  %1231 = vmatprep.subr.mxu0 0.0
  %1232 = vmatpush1.msra.mxu0 0.0
  %1233 = vmatprep.subr.mxu0 0.0
  %1234 = vmatpush1.msra.mxu0 0.0
  %1235 = vmatprep.subr.mxu0 0.0
  %1236 = vmatpush1.msra.mxu0 0.0
  %1237 = vmatprep.mubr.f32.mxu0 0.0
  %1238 = vmatmul.mubr.f32.gmra.mrb[0].mxu0 %v1168
  %v1239 = vpop.f32.mrb[0].mxu0
  %v1240 = vadd.f32 0.0, %v1239
  %v1241 = vpop.f32.mrb[0].mxu0
  %1242 = vmatprep.mubr.f32.mxu0 0.0
  %1243 = vmatmul.mubr.f32.gmra.mrb[0].mxu0 %v1171
  %v1244 = vpop.f32.mrb[0].mxu0
  %v1245 = vadd.f32 0.0, %v1244
  %v1246 = vpop.f32.mrb[0].mxu0
  %1247 = vdwg.mxu0
  %p1248 = scmp.eq.s32.totalorder 0, 0
  // Predicated region
  $region50: #{mpnn_forward.5} parent=0 // pred_check
    %p1249 = pneg %p1248
  $region51: #{mpnn_forward.5} parent=0 // pred_check_branch
    %1251 = sbr.rel (%p1249) target = $region53
  $region52: #{mpnn_forward.5} parent=0 // pred_region
    %1252 = vst.msk [vmem:[%s12] sm:$0xff] %vm247, 0.0
    %1253 = vst.msk [vmem:[%s12 + $0x8] sm:$0xff] %vm247, 0.0
  $region53: #{mpnn_forward.5} parent=0 // pred_fallthru
    _
  %v1254 = vld [vmem:[%s12] sm:$0xff]
  %v1255 = vld [vmem:[%s12 + $0x8] sm:$0xff]
  %v1256 = vadd.f32 %v1254, %v1240
  %v1257 = vadd.f32 %v1255, %v1245
  %1258 = vst.msk [vmem:[%s12] sm:$0xff] %vm247, %v1256
  %1259 = vst.msk [vmem:[%s12 + $0x8] sm:$0xff] %vm247, %v1257
  // Predicated region
  $region54: #{mpnn_forward.5} parent=0 // pred_check
    _
  $region55: #{mpnn_forward.5} parent=0 // pred_check_branch
    %1261 = sbr.rel (0) target = $region57
  $region56: #{mpnn_forward.5} parent=0 // pred_region
    _
  $region57: #{mpnn_forward.5} parent=0 // pred_fallthru
    _
  // Predicated region
  $region58: #{mpnn_forward.5} parent=0 // pred_check
    _
  $region59: #{mpnn_forward.5} parent=0 // pred_check_branch
    %1263 = sbr.rel (0) target = $region61
  $region60: #{mpnn_forward.5} parent=0 // pred_region
    _
  $region61: #{mpnn_forward.5} parent=0 // pred_fallthru
    _

</llo_original>
